<compile_context>
chip_gen: v7x
topology: tpu7x:2x2x1
jax: 0.10.0
libtpu: 0.0.40
codegen_flags: <defaults>
</compile_context>

<pallas_src>
import numpy as np

import jax
import jax.numpy as jnp
from jax.experimental import pallas as pl
from jax.experimental import pallas as _pl_unused  # noqa: F401
from jax.experimental.pallas import tpu as pltpu  # noqa: F401  (not needed for gridless call)


# --------------------------- host-side packing helpers ---------------------------

def pack_activation(x_nchw):
    """(N, C, H, W) -> (H, W*N*C) with lane index = w*(N*C) + n*C + c."""
    n, c, h, w = x_nchw.shape
    return jnp.transpose(x_nchw, (2, 3, 0, 1)).reshape(h, w * n * c)


def build_banded_conv(weight_oihw, w_in, w_out, n_batch):
    """Encode a valid 2D conv as ONE flattened banded matrix.

    Returns M of shape (k_h * w_in*N*Cin, w_out*N*Cout) such that, with
      lhs[h, ki*(W*N*Cin) + lane] = act[h + ki, lane],
    out[h] = lhs[h] @ M reproduces the PyTorch Conv2d (cross-correlation) output
    row h for every sample n (per-sample block diagonal folded into the weights).
    """
    w = np.asarray(weight_oihw, np.float32)          # (Cout, Cin, kh, kw)
    cout, cin, kh, kw = w.shape
    m = np.zeros((kh, w_in * n_batch * cin, w_out * n_batch * cout), np.float32)
    for ki in range(kh):
        for kj in range(kw):
            blk = w[:, :, ki, kj].T                  # (Cin, Cout)
            for wo in range(w_out):
                wp = wo + kj                         # input column feeding output column wo
                for n in range(n_batch):
                    r0 = wp * n_batch * cin + n * cin
                    c0 = wo * n_batch * cout + n * cout
                    m[ki, r0:r0 + cin, c0:c0 + cout] = blk
    return m.reshape(kh * w_in * n_batch * cin, w_out * n_batch * cout)


def build_banded_head(wl_uchw, n_batch):
    """Linear (no bias) over the (c,h,w)-flattened conv2 output, per-sample block diagonal.

    wl_uchw: (U, C, H2, W2).  Returns WH (H2*W2*N*C, N*U) so that with
      zlhs[0, hh*(W2*N*C) + lane] = a2[hh, lane],
    z = zlhs @ WH reproduces the Linear layer (column order: n-major, then unit).
    """
    w = np.asarray(wl_uchw, np.float32)
    u, c, h2, w2 = w.shape
    m = np.zeros((h2, w2 * n_batch * c, n_batch * u), np.float32)
    for hh in range(h2):
        for ww in range(w2):
            blk = w[:, :, hh, ww].T                  # (C, U)
            for n in range(n_batch):
                r0 = ww * n_batch * c + n * c
                m[hh, r0:r0 + c, n * u:(n + 1) * u] = blk
    return m.reshape(h2 * w2 * n_batch * c, n_batch * u)


def pack_bn_table(arr_chw, n_batch):
    """Per-(c,h,w) BN affine term -> (H, W*N*C) table (tiled over the batch lanes)."""
    a = np.asarray(arr_chw, np.float32)
    c, h, w = a.shape
    t = a.transpose(1, 2, 0)                          # (H, W, C)
    t = np.broadcast_to(t[:, :, None, :], (h, w, n_batch, c))
    return np.array(t).reshape(h, w * n_batch * c)


def pack_bn_blob(tb1_s, tb1_t, tb2_s, tb2_t, tb3_s, tb3_t):
    """Stack all six BN affine tables into one lane-padded f32 blob (single DMA)."""
    h1, l1 = tb1_s.shape
    h2, l2 = tb2_s.shape
    nu = tb3_s.shape[-1]
    lmax = max(l1, l2, nu)
    blob = np.zeros((2 * h1 + 2 * h2 + 2, lmax), np.float32)
    blob[0:h1, :l1] = tb1_s
    blob[h1:2 * h1, :l1] = tb1_t
    blob[2 * h1:2 * h1 + h2, :l2] = tb2_s
    blob[2 * h1 + h2:2 * h1 + 2 * h2, :l2] = tb2_t
    blob[2 * h1 + 2 * h2, :nu] = np.asarray(tb3_s, np.float32).reshape(-1)
    blob[2 * h1 + 2 * h2 + 1, :nu] = np.asarray(tb3_t, np.float32).reshape(-1)
    return blob


# --------------------------------- fused kernel ----------------------------------

def _full_spec(arr):
    shape = arr.shape
    return pl.BlockSpec(shape, lambda *_: (0,) * len(shape))


def varynet_forward(x_nchw, p):
    n, cin, h, w = x_nchw.shape
    k1, k2, units = p["k1"], p["k2"], p["n_units"]
    h1 = h - k1 + 1
    h2 = h1 - k2 + 1
    l1 = p["m1"].shape[1]          # W1*N*C1
    l2 = p["m2"].shape[1]          # W2*N*C2
    nu = n * units

    x2 = pack_activation(x_nchw)   # (H, W*N*Cin) -- host-side relayout, free

    # BN blob row offsets
    r2 = 2 * h1
    r3 = 2 * h1 + 2 * h2

    def kernel(x_ref, m1_ref, m2_ref, wh_ref, bn_ref, o_ref):
        # ---- layer 1: conv (one bf16 dot) + (folded bias) BN affine + ReLU ----
        xb = x_ref[...].astype(jnp.bfloat16)                     # cast once
        lhs1 = jnp.concatenate([xb[ki:ki + h1, :] for ki in range(k1)], axis=1)
        acc1 = jnp.dot(lhs1, m1_ref[...], preferred_element_type=jnp.float32)
        a1 = jnp.maximum(acc1 * bn_ref[0:h1, 0:l1] + bn_ref[h1:2 * h1, 0:l1], 0.0)
        a1b = a1.astype(jnp.bfloat16)                            # cast once

        # ---- layer 2 ----
        lhs2 = jnp.concatenate([a1b[ki:ki + h2, :] for ki in range(k2)], axis=1)
        acc2 = jnp.dot(lhs2, m2_ref[...], preferred_element_type=jnp.float32)
        a2 = jnp.maximum(acc2 * bn_ref[r2:r2 + h2, 0:l2]
                         + bn_ref[r2 + h2:r2 + 2 * h2, 0:l2], 0.0)
        a2b = a2.astype(jnp.bfloat16)                            # cast once

        # ---- head: Linear(no bias) as one bf16 dot + BN affine + Softplus ----
        zlhs = jnp.concatenate([a2b[hh:hh + 1, :] for hh in range(h2)], axis=1)
        z = jnp.dot(zlhs, wh_ref[...], preferred_element_type=jnp.float32)
        z = z * bn_ref[r3:r3 + 1, 0:nu] + bn_ref[r3 + 1:r3 + 2, 0:nu]
        # PyTorch Softplus (beta=1, threshold=20)
        sp = jnp.where(z > 20.0, z, jnp.log1p(jnp.exp(jnp.minimum(z, 20.0))))
        o_ref[...] = sp.astype(o_ref.dtype)

    args = (x2, p["m1"], p["m2"], p["wh"], p["bn"])

    out = pl.pallas_call(
        kernel,
        out_shape=jax.ShapeDtypeStruct((1, nu), jnp.float32),
        in_specs=[_full_spec(a) for a in args],
        out_specs=pl.BlockSpec((1, nu), lambda *_: (0, 0)),
    )(*args)
    return out.reshape(n, units)   # lanes are n-major, so row-major reshape is correct


# --------------------------------- pure-JAX reference ----------------------------

def reference_forward(x, w1, b1, w2, b2, wl, bn1_s, bn1_t, bn2_s, bn2_t, bn3_s, bn3_t):
    hi = jax.lax.Precision.HIGHEST
    r = lambda a: a.astype(jnp.bfloat16).astype(jnp.float32)   # mimic bf16 MXU inputs
    dn = ("NCHW", "OIHW", "NCHW")
    y = jax.lax.conv_general_dilated(r(x), r(w1), (1, 1), "VALID",
                                     dimension_numbers=dn, precision=hi)
    y = (y + b1[None, :, None, None]) * bn1_s[None] + bn1_t[None]
    y = jnp.maximum(y, 0.0)
    y = jax.lax.conv_general_dilated(r(y), r(w2), (1, 1), "VALID",
                                     dimension_numbers=dn, precision=hi)
    y = (y + b2[None, :, None, None]) * bn2_s[None] + bn2_t[None]
    y = jnp.maximum(y, 0.0)
    flat = y.reshape(y.shape[0], -1)                  # (N, C2*H2*W2), (c,h,w) order
    z = jnp.dot(r(flat), r(wl.reshape(wl.shape[0], -1).T), precision=hi)
    z = z * bn3_s[None, :] + bn3_t[None, :]
    return jnp.where(z > 20.0, z, jnp.log1p(jnp.exp(jnp.minimum(z, 20.0))))


# --------------------------------------- main ------------------------------------

if __name__ == "__main__":
    # Small, module-consistent shapes: img_shape=(4,16,16), chans=[8,8], ksizes=(7,5),
    # n_units=5, batch=2.
    N, Cin, H, W = 2, 4, 16, 16
    C1, C2 = 8, 8
    k1, k2 = 7, 5
    n_units = 5
    H1, W1 = H - k1 + 1, W - k1 + 1        # 10 x 10
    H2, W2 = H1 - k2 + 1, W1 - k2 + 1      # 6 x 6

    key = jax.random.PRNGKey(0)
    ks = jax.random.split(key, 10)

    # Dense parameters in PyTorch conventions.
    w1 = 0.05 * jax.random.normal(ks[0], (C1, Cin, k1, k1), jnp.float32)     # OIHW
    b1 = 0.05 * jax.random.normal(ks[1], (C1,), jnp.float32)
    w2 = 0.05 * jax.random.normal(ks[2], (C2, C1, k2, k2), jnp.float32)
    b2 = 0.05 * jax.random.normal(ks[3], (C2,), jnp.float32)
    wl = 0.05 * jax.random.normal(ks[4], (n_units, C2, H2, W2), jnp.float32)  # (U, c,h,w)

    def bn_params(k, shape, eps=1e-3):
        ka, kb, kc, kd = jax.random.split(k, 4)
        gamma = 1.0 + 0.1 * jax.random.normal(ka, shape, jnp.float32)
        beta = 0.1 * jax.random.normal(kb, shape, jnp.float32)
        mean = 0.1 * jax.random.normal(kc, shape, jnp.float32)
        var = jnp.abs(1.0 + 0.1 * jax.random.normal(kd, shape, jnp.float32))
        scale = jnp.abs(gamma) / jnp.sqrt(var + eps)   # AbsBatchNorm uses |weight|
        shift = beta - mean * scale
        return scale, shift

    bn1_s, bn1_t = bn_params(ks[5], (C1, H1, W1))      # spatially heterogeneous (bnorm_d=1)
    bn2_s, bn2_t = bn_params(ks[6], (C2, H2, W2))
    bn3_s, bn3_t = bn_params(ks[7], (n_units,))

    x = jax.random.normal(ks[8], (N, Cin, H, W), jnp.float32)   # NCHW, like PyTorch

    # Fold conv biases into the BN shift: (y + b)*s + t == y*s + (t + b*s).
    sh1 = bn1_t + b1[:, None, None] * bn1_s
    sh2 = bn2_t + b2[:, None, None] * bn2_s

    bn_blob = pack_bn_blob(
        pack_bn_table(bn1_s, N), pack_bn_table(sh1, N),
        pack_bn_table(bn2_s, N), pack_bn_table(sh2, N),
        np.tile(np.asarray(bn3_s, np.float32), N),
        np.tile(np.asarray(bn3_t, np.float32), N),
    )

    params = dict(
        k1=k1, k2=k2, n_units=n_units,
        m1=jnp.asarray(build_banded_conv(w1, W, W1, N), jnp.bfloat16),   # (k1*W*N*Cin, W1*N*C1)
        m2=jnp.asarray(build_banded_conv(w2, W1, W2, N), jnp.bfloat16),  # (k2*W1*N*C1, W2*N*C2)
        wh=jnp.asarray(build_banded_head(wl, N), jnp.bfloat16),          # (H2*W2*N*C2, N*U)
        bn=jnp.asarray(bn_blob, jnp.float32),                            # all six BN tables
    )

    out = varynet_forward(x, params)
    out = jax.block_until_ready(out)

    ref = reference_forward(x, w1, b1, w2, b2, wl,
                            bn1_s, bn1_t, bn2_s, bn2_t, bn3_s, bn3_t)

    assert out.shape == (N, n_units), out.shape
    assert bool(jnp.all(jnp.isfinite(out)))
    err = float(jnp.max(jnp.abs(out - ref)))
    assert err < 1e-2, f"kernel/reference mismatch, max abs err = {err}"
    print("KERNEL_OK")
</pallas_src>

<mosaic_0001>
module attributes {stable_mosaic.version = 11 : i64} {
  func.func @kernel(%arg0: memref<16x128xf32, #tpu.memory_space<vmem>>, %arg1: memref<896x160xbf16, #tpu.memory_space<vmem>>, %arg2: memref<800x96xbf16, #tpu.memory_space<vmem>>, %arg3: memref<576x10xbf16, #tpu.memory_space<vmem>>, %arg4: memref<34x160xf32, #tpu.memory_space<vmem>>, %arg5: memref<1x10xf32, #tpu.memory_space<vmem>>) attributes {dimension_semantics = [], scalar_prefetch = 0 : i64, scratch_operands = 0 : i64, tpu.core_type = #tpu.core_type<tc>} {
    %c0 = arith.constant 0 : index
    %c0_0 = arith.constant 0 : index
    %0 = vector.load %arg0[%c0, %c0_0] : memref<16x128xf32, #tpu.memory_space<vmem>>, vector<16x128xf32>
    %1 = arith.truncf %0 : vector<16x128xf32> to vector<16x128xbf16>
    %2 = vector.extract_strided_slice %1 {offsets = [0, 0], sizes = [10, 128], strides = [1, 1]} : vector<16x128xbf16> to vector<10x128xbf16>
    %3 = vector.extract_strided_slice %1 {offsets = [1, 0], sizes = [10, 128], strides = [1, 1]} : vector<16x128xbf16> to vector<10x128xbf16>
    %4 = vector.extract_strided_slice %1 {offsets = [2, 0], sizes = [10, 128], strides = [1, 1]} : vector<16x128xbf16> to vector<10x128xbf16>
    %5 = vector.extract_strided_slice %1 {offsets = [3, 0], sizes = [10, 128], strides = [1, 1]} : vector<16x128xbf16> to vector<10x128xbf16>
    %6 = vector.extract_strided_slice %1 {offsets = [4, 0], sizes = [10, 128], strides = [1, 1]} : vector<16x128xbf16> to vector<10x128xbf16>
    %7 = vector.extract_strided_slice %1 {offsets = [5, 0], sizes = [10, 128], strides = [1, 1]} : vector<16x128xbf16> to vector<10x128xbf16>
    %8 = vector.extract_strided_slice %1 {offsets = [6, 0], sizes = [10, 128], strides = [1, 1]} : vector<16x128xbf16> to vector<10x128xbf16>
    %9 = tpu.concatenate %2, %3, %4, %5, %6, %7, %8 in 1 : vector<10x128xbf16>, vector<10x128xbf16>, vector<10x128xbf16>, vector<10x128xbf16>, vector<10x128xbf16>, vector<10x128xbf16>, vector<10x128xbf16> -> vector<10x896xbf16>
    %c0_1 = arith.constant 0 : index
    %c0_2 = arith.constant 0 : index
    %10 = vector.load %arg1[%c0_1, %c0_2] : memref<896x160xbf16, #tpu.memory_space<vmem>>, vector<896x160xbf16>
    %cst = arith.constant dense<0.000000e+00> : vector<10x160xf32>
    %11 = tpu.matmul %9, %10, %cst {dimension_numbers = #tpu.dot_dimension_numbers<[1], [0], [0], [1], [0, 0, 1, 1], [], []>} : vector<10x896xbf16>, vector<896x160xbf16>, vector<10x160xf32> -> vector<10x160xf32>
    %c0_3 = arith.constant 0 : index
    %c0_4 = arith.constant 0 : index
    %12 = vector.load %arg4[%c0_3, %c0_4] : memref<34x160xf32, #tpu.memory_space<vmem>>, vector<10x160xf32>
    %13 = arith.mulf %11, %12 : vector<10x160xf32>
    %c10 = arith.constant 10 : index
    %c0_5 = arith.constant 0 : index
    %14 = vector.load %arg4[%c10, %c0_5] : memref<34x160xf32, #tpu.memory_space<vmem>>, vector<10x160xf32>
    %15 = arith.addf %13, %14 : vector<10x160xf32>
    %cst_6 = arith.constant 0.000000e+00 : f32
    %16 = vector.broadcast %cst_6 : f32 to vector<10x160xf32>
    %17 = arith.maximumf %15, %16 : vector<10x160xf32>
    %18 = arith.truncf %17 : vector<10x160xf32> to vector<10x160xbf16>
    %19 = vector.extract_strided_slice %18 {offsets = [0, 0], sizes = [6, 160], strides = [1, 1]} : vector<10x160xbf16> to vector<6x160xbf16>
    %20 = vector.extract_strided_slice %18 {offsets = [1, 0], sizes = [6, 160], strides = [1, 1]} : vector<10x160xbf16> to vector<6x160xbf16>
    %21 = vector.extract_strided_slice %18 {offsets = [2, 0], sizes = [6, 160], strides = [1, 1]} : vector<10x160xbf16> to vector<6x160xbf16>
    %22 = vector.extract_strided_slice %18 {offsets = [3, 0], sizes = [6, 160], strides = [1, 1]} : vector<10x160xbf16> to vector<6x160xbf16>
    %23 = vector.extract_strided_slice %18 {offsets = [4, 0], sizes = [6, 160], strides = [1, 1]} : vector<10x160xbf16> to vector<6x160xbf16>
    %24 = tpu.concatenate %19, %20, %21, %22, %23 in 1 : vector<6x160xbf16>, vector<6x160xbf16>, vector<6x160xbf16>, vector<6x160xbf16>, vector<6x160xbf16> -> vector<6x800xbf16>
    %c0_7 = arith.constant 0 : index
    %c0_8 = arith.constant 0 : index
    %25 = vector.load %arg2[%c0_7, %c0_8] : memref<800x96xbf16, #tpu.memory_space<vmem>>, vector<800x96xbf16>
    %cst_9 = arith.constant dense<0.000000e+00> : vector<6x96xf32>
    %26 = tpu.matmul %24, %25, %cst_9 {dimension_numbers = #tpu.dot_dimension_numbers<[1], [0], [0], [1], [0, 0, 1, 1], [], []>} : vector<6x800xbf16>, vector<800x96xbf16>, vector<6x96xf32> -> vector<6x96xf32>
    %c20 = arith.constant 20 : index
    %c0_10 = arith.constant 0 : index
    %27 = vector.load %arg4[%c20, %c0_10] : memref<34x160xf32, #tpu.memory_space<vmem>>, vector<6x96xf32>
    %28 = arith.mulf %26, %27 : vector<6x96xf32>
    %c26 = arith.constant 26 : index
    %c0_11 = arith.constant 0 : index
    %29 = vector.load %arg4[%c26, %c0_11] : memref<34x160xf32, #tpu.memory_space<vmem>>, vector<6x96xf32>
    %30 = arith.addf %28, %29 : vector<6x96xf32>
    %cst_12 = arith.constant 0.000000e+00 : f32
    %31 = vector.broadcast %cst_12 : f32 to vector<6x96xf32>
    %32 = arith.maximumf %30, %31 : vector<6x96xf32>
    %33 = arith.truncf %32 : vector<6x96xf32> to vector<6x96xbf16>
    %34 = vector.extract_strided_slice %33 {offsets = [0, 0], sizes = [1, 96], strides = [1, 1]} : vector<6x96xbf16> to vector<1x96xbf16>
    %35 = vector.extract_strided_slice %33 {offsets = [1, 0], sizes = [1, 96], strides = [1, 1]} : vector<6x96xbf16> to vector<1x96xbf16>
    %36 = vector.extract_strided_slice %33 {offsets = [2, 0], sizes = [1, 96], strides = [1, 1]} : vector<6x96xbf16> to vector<1x96xbf16>
    %37 = vector.extract_strided_slice %33 {offsets = [3, 0], sizes = [1, 96], strides = [1, 1]} : vector<6x96xbf16> to vector<1x96xbf16>
    %38 = vector.extract_strided_slice %33 {offsets = [4, 0], sizes = [1, 96], strides = [1, 1]} : vector<6x96xbf16> to vector<1x96xbf16>
    %39 = vector.extract_strided_slice %33 {offsets = [5, 0], sizes = [1, 96], strides = [1, 1]} : vector<6x96xbf16> to vector<1x96xbf16>
    %40 = tpu.concatenate %34, %35, %36, %37, %38, %39 in 1 : vector<1x96xbf16>, vector<1x96xbf16>, vector<1x96xbf16>, vector<1x96xbf16>, vector<1x96xbf16>, vector<1x96xbf16> -> vector<1x576xbf16>
    %c0_13 = arith.constant 0 : index
    %c0_14 = arith.constant 0 : index
    %41 = vector.load %arg3[%c0_13, %c0_14] : memref<576x10xbf16, #tpu.memory_space<vmem>>, vector<576x10xbf16>
    %cst_15 = arith.constant dense<0.000000e+00> : vector<1x10xf32>
    %42 = tpu.matmul %40, %41, %cst_15 {dimension_numbers = #tpu.dot_dimension_numbers<[1], [0], [0], [1], [0, 0, 1, 1], [], []>} : vector<1x576xbf16>, vector<576x10xbf16>, vector<1x10xf32> -> vector<1x10xf32>
    %c32 = arith.constant 32 : index
    %c0_16 = arith.constant 0 : index
    %43 = vector.load %arg4[%c32, %c0_16] : memref<34x160xf32, #tpu.memory_space<vmem>>, vector<1x10xf32>
    %44 = arith.mulf %42, %43 : vector<1x10xf32>
    %c33 = arith.constant 33 : index
    %c0_17 = arith.constant 0 : index
    %45 = vector.load %arg4[%c33, %c0_17] : memref<34x160xf32, #tpu.memory_space<vmem>>, vector<1x10xf32>
    %46 = arith.addf %44, %45 : vector<1x10xf32>
    %cst_18 = arith.constant 2.000000e+01 : f32
    %47 = vector.broadcast %cst_18 : f32 to vector<1x10xf32>
    %48 = arith.cmpf ogt, %46, %47 : vector<1x10xf32>
    %cst_19 = arith.constant 2.000000e+01 : f32
    %49 = vector.broadcast %cst_19 : f32 to vector<1x10xf32>
    %50 = arith.minimumf %46, %49 : vector<1x10xf32>
    %51 = math.exp %50 : vector<1x10xf32>
    %52 = math.log1p %51 : vector<1x10xf32>
    %53 = arith.select %48, %46, %52 : vector<1x10xi1>, vector<1x10xf32>
    %c0_20 = arith.constant 0 : index
    %c0_21 = arith.constant 0 : index
    %54 = vector.load %arg5[%c0_20, %c0_21] : memref<1x10xf32, #tpu.memory_space<vmem>>, vector<1x10xf32>
    tpu.vector_store %arg5[%c0_20, %c0_21], %53 {strides = array<i32>} : memref<1x10xf32, #tpu.memory_space<vmem>>, vector<1x10xf32>,
    return
  }
}

</mosaic_0001>

<llo_original>
// kernel: tpu_custom_call.1
$region0: #{tpu_custom_call.1}
  #allocation0 [shape = 'u32[]', space=smem, size = 0x4, offset = 0x4, fixed_abs, tag = 'smem constant byte address 0x4 - core index']
  #allocation1 [shape = 'u32[144,128]{1,0:T(1,128)}', space=vmem, size = 0x12000, scoped, tag = 'internal scratch']
  %s0 = inlined_call_operand.vmem [shape: f32[16,128], index: 0, kind: input, shape index: {}]
  %s1 = inlined_call_operand.vmem [shape: bf16[896,160], index: 1, kind: input, shape index: {}]
  %s2 = inlined_call_operand.vmem [shape: bf16[800,96], index: 2, kind: input, shape index: {}]
  %s3 = inlined_call_operand.vmem [shape: bf16[576,10], index: 3, kind: input, shape index: {}]
  %s4 = inlined_call_operand.vmem [shape: f32[34,160], index: 4, kind: input, shape index: {}]
  %s5 = inlined_call_operand.hbm [shape: f32[1,10], index: 5, kind: output, shape index: {}]
  %s6 = sld [smem:[#allocation0]]
  $region30: #{tpu_custom_call.1} parent=0
    _
  %s8 = ssub.s32 1, %s6
  %s9 = scalar_select 0, %s8, %s6
  $region1: #{tpu_custom_call.1} parent=0
    #allocation2 [shape = 'u8[512]{0}', space=vmem, size = 0x400, scoped, tag = 'output window, operand 0, single buffered']
    #allocation3 [shape = 's32[1]{0}', space=sflag, size = 0x4, scoped, tag = 'scoped memory for tpu_custom_call.1']
    %10 = vsyncpa [#allocation3], 0
    // Predicated region
    $region2: #{tpu_custom_call.1} parent=1 // pred_check
      _
    $region3: #{tpu_custom_call.1} parent=1 // pred_check_branch
      %12 = sbr.rel (0) target = $region5
    $region4: #{tpu_custom_call.1} parent=1 // pred_region
      _
    $region5: #{tpu_custom_call.1} parent=1 // pred_fallthru
      _
    // Predicated region
    $region6: #{tpu_custom_call.1} parent=1 // pred_check
      _
    $region7: #{tpu_custom_call.1} parent=1 // pred_check_branch
      %14 = sbr.rel (0) target = $region9
    $region8: #{tpu_custom_call.1} parent=1 // pred_region
      _
    $region9: #{tpu_custom_call.1} parent=1 // pred_fallthru
      _
    // Predicated region
    $region10: #{tpu_custom_call.1} parent=1 // pred_check
      _
    $region11: #{tpu_custom_call.1} parent=1 // pred_check_branch
      %16 = sbr.rel (0) target = $region13
    $region12: #{tpu_custom_call.1} parent=1 // pred_region
      _
    $region13: #{tpu_custom_call.1} parent=1 // pred_fallthru
      _
    // Predicated region
    $region14: #{tpu_custom_call.1} parent=1 // pred_check
      _
    $region15: #{tpu_custom_call.1} parent=1 // pred_check_branch
      %18 = sbr.rel (0) target = $region17
    $region16: #{tpu_custom_call.1} parent=1 // pred_region
      _
    $region17: #{tpu_custom_call.1} parent=1 // pred_fallthru
      _
    // Predicated region
    $region18: #{tpu_custom_call.1} parent=1 // pred_check
      _
    $region19: #{tpu_custom_call.1} parent=1 // pred_check_branch
      %20 = sbr.rel (0) target = $region21
    $region20: #{tpu_custom_call.1} parent=1 // pred_region
      _
    $region21: #{tpu_custom_call.1} parent=1 // pred_fallthru
      _
    %v22 = vld [vmem:[%s0] sm:$0xff]
    %v23 = vld [vmem:[%s0 + $0x8] sm:$0xff]
    %v24 = vpack.c.bf16 %v23, %v22
    %v26 = vshrl.u32 %v24, 16
    %v28 = vshll.u32 %v24, 16
    %v30 = vrot.slane %v28, 1
    %v31 = vor.u32 %v26, %v30
    %v34 = vrot.slane %v24, 1
    %v36 = vrot.slane %v26, 1
    %v37 = vrot.slane %v28, 2
    %v38 = vor.u32 %v36, %v37
    %v40 = vrot.slane %v24, 2
    %v42 = vrot.slane %v26, 2
    %v43 = vrot.slane %v28, 3
    %v44 = vor.u32 %v42, %v43
    %v46 = vrot.slane %v24, 3
    %v48 = vld [vmem:[%s1] sm:$0xff]
    %v49 = vld [vmem:[%s1 + $0x8] sm:$0xff]
    %v50 = vld [vmem:[%s1 + $0x10] sm:$0xff]
    %v51 = vld [vmem:[%s1 + $0x18] sm:$0xff]
    %v52 = vld [vmem:[%s1 + $0x20] sm:$0xff]
    %v53 = vld [vmem:[%s1 + $0x28] sm:$0xff]
    %v54 = vld [vmem:[%s1 + $0x30] sm:$0xff]
    %v55 = vld [vmem:[%s1 + $0x38] sm:$0xff]
    %v56 = vld [vmem:[%s1 + $0x40] sm:$0xff]
    %v57 = vld [vmem:[%s1 + $0x48] sm:$0xff]
    %v58 = vld [vmem:[%s1 + $0x50] sm:$0xff]
    %v59 = vld [vmem:[%s1 + $0x58] sm:$0xff]
    %v60 = vld [vmem:[%s1 + $0x60] sm:$0xff]
    %v61 = vld [vmem:[%s1 + $0x68] sm:$0xff]
    %v62 = vld [vmem:[%s1 + $0x70] sm:$0xff]
    %v63 = vld [vmem:[%s1 + $0x78] sm:$0xff]
    %v64 = vld [vmem:[%s1 + $0x80] sm:$0xff]
    %v65 = vld [vmem:[%s1 + $0x88] sm:$0xff]
    %v66 = vld [vmem:[%s1 + $0x90] sm:$0xff]
    %v67 = vld [vmem:[%s1 + $0x98] sm:$0xff]
    %v68 = vld [vmem:[%s1 + $0xa0] sm:$0xff]
    %v69 = vld [vmem:[%s1 + $0xa8] sm:$0xff]
    %v70 = vld [vmem:[%s1 + $0xb0] sm:$0xff]
    %v71 = vld [vmem:[%s1 + $0xb8] sm:$0xff]
    %v72 = vld [vmem:[%s1 + $0xc0] sm:$0xff]
    %v73 = vld [vmem:[%s1 + $0xc8] sm:$0xff]
    %v74 = vld [vmem:[%s1 + $0xd0] sm:$0xff]
    %v75 = vld [vmem:[%s1 + $0xd8] sm:$0xff]
    %v76 = vld [vmem:[%s1 + $0xe0] sm:$0xff]
    %v77 = vld [vmem:[%s1 + $0xe8] sm:$0xff]
    %v78 = vld [vmem:[%s1 + $0xf0] sm:$0xff]
    %v79 = vld [vmem:[%s1 + $0xf8] sm:$0xff]
    %v80 = vld [vmem:[%s1 + $0x100] sm:$0xff]
    %v81 = vld [vmem:[%s1 + $0x108] sm:$0xff]
    %v82 = vld [vmem:[%s1 + $0x110] sm:$0xff]
    %v83 = vld [vmem:[%s1 + $0x118] sm:$0xff]
    %v84 = vld [vmem:[%s1 + $0x120] sm:$0xff]
    %v85 = vld [vmem:[%s1 + $0x128] sm:$0xff]
    %v86 = vld [vmem:[%s1 + $0x130] sm:$0xff]
    %v87 = vld [vmem:[%s1 + $0x138] sm:$0xff]
    %v88 = vld [vmem:[%s1 + $0x140] sm:$0xff]
    %v89 = vld [vmem:[%s1 + $0x148] sm:$0xff]
    %v90 = vld [vmem:[%s1 + $0x150] sm:$0xff]
    %v91 = vld [vmem:[%s1 + $0x158] sm:$0xff]
    %v92 = vld [vmem:[%s1 + $0x160] sm:$0xff]
    %v93 = vld [vmem:[%s1 + $0x168] sm:$0xff]
    %v94 = vld [vmem:[%s1 + $0x170] sm:$0xff]
    %v95 = vld [vmem:[%s1 + $0x178] sm:$0xff]
    %v96 = vld [vmem:[%s1 + $0x180] sm:$0xff]
    %v97 = vld [vmem:[%s1 + $0x188] sm:$0xff]
    %v98 = vld [vmem:[%s1 + $0x190] sm:$0xff]
    %v99 = vld [vmem:[%s1 + $0x198] sm:$0xff]
    %v100 = vld [vmem:[%s1 + $0x1a0] sm:$0xff]
    %v101 = vld [vmem:[%s1 + $0x1a8] sm:$0xff]
    %v102 = vld [vmem:[%s1 + $0x1b0] sm:$0xff]
    %v103 = vld [vmem:[%s1 + $0x1b8] sm:$0xff]
    %v104 = vld [vmem:[%s1 + $0x1c0] sm:$0xff]
    %v105 = vld [vmem:[%s1 + $0x1c8] sm:$0xff]
    %v106 = vld [vmem:[%s1 + $0x1d0] sm:$0xff]
    %v107 = vld [vmem:[%s1 + $0x1d8] sm:$0xff]
    %v108 = vld [vmem:[%s1 + $0x1e0] sm:$0xff]
    %v109 = vld [vmem:[%s1 + $0x1e8] sm:$0xff]
    %v110 = vld [vmem:[%s1 + $0x1f0] sm:$0xff]
    %v111 = vld [vmem:[%s1 + $0x1f8] sm:$0xff]
    %v112 = vld [vmem:[%s1 + $0x200] sm:$0xff]
    %v113 = vld [vmem:[%s1 + $0x208] sm:$0xff]
    %v114 = vld [vmem:[%s1 + $0x210] sm:$0xff]
    %v115 = vld [vmem:[%s1 + $0x218] sm:$0xff]
    %v116 = vld [vmem:[%s1 + $0x220] sm:$0xff]
    %v117 = vld [vmem:[%s1 + $0x228] sm:$0xff]
    %v118 = vld [vmem:[%s1 + $0x230] sm:$0xff]
    %v119 = vld [vmem:[%s1 + $0x238] sm:$0xff]
    %v120 = vld [vmem:[%s1 + $0x240] sm:$0xff]
    %v121 = vld [vmem:[%s1 + $0x248] sm:$0xff]
    %v122 = vld [vmem:[%s1 + $0x250] sm:$0xff]
    %v123 = vld [vmem:[%s1 + $0x258] sm:$0xff]
    %v124 = vld [vmem:[%s1 + $0x260] sm:$0xff]
    %v125 = vld [vmem:[%s1 + $0x268] sm:$0xff]
    %v126 = vld [vmem:[%s1 + $0x270] sm:$0xff]
    %v127 = vld [vmem:[%s1 + $0x278] sm:$0xff]
    %v128 = vld [vmem:[%s1 + $0x280] sm:$0xff]
    %v129 = vld [vmem:[%s1 + $0x288] sm:$0xff]
    %v130 = vld [vmem:[%s1 + $0x290] sm:$0xff]
    %v131 = vld [vmem:[%s1 + $0x298] sm:$0xff]
    %v132 = vld [vmem:[%s1 + $0x2a0] sm:$0xff]
    %v133 = vld [vmem:[%s1 + $0x2a8] sm:$0xff]
    %v134 = vld [vmem:[%s1 + $0x2b0] sm:$0xff]
    %v135 = vld [vmem:[%s1 + $0x2b8] sm:$0xff]
    %v136 = vld [vmem:[%s1 + $0x2c0] sm:$0xff]
    %v137 = vld [vmem:[%s1 + $0x2c8] sm:$0xff]
    %v138 = vld [vmem:[%s1 + $0x2d0] sm:$0xff]
    %v139 = vld [vmem:[%s1 + $0x2d8] sm:$0xff]
    %v140 = vld [vmem:[%s1 + $0x2e0] sm:$0xff]
    %v141 = vld [vmem:[%s1 + $0x2e8] sm:$0xff]
    %v142 = vld [vmem:[%s1 + $0x2f0] sm:$0xff]
    %v143 = vld [vmem:[%s1 + $0x2f8] sm:$0xff]
    %v144 = vld [vmem:[%s1 + $0x300] sm:$0xff]
    %v145 = vld [vmem:[%s1 + $0x308] sm:$0xff]
    %v146 = vld [vmem:[%s1 + $0x310] sm:$0xff]
    %v147 = vld [vmem:[%s1 + $0x318] sm:$0xff]
    %v148 = vld [vmem:[%s1 + $0x320] sm:$0xff]
    %v149 = vld [vmem:[%s1 + $0x328] sm:$0xff]
    %v150 = vld [vmem:[%s1 + $0x330] sm:$0xff]
    %v151 = vld [vmem:[%s1 + $0x338] sm:$0xff]
    %v152 = vld [vmem:[%s1 + $0x340] sm:$0xff]
    %v153 = vld [vmem:[%s1 + $0x348] sm:$0xff]
    %v154 = vld [vmem:[%s1 + $0x350] sm:$0xff]
    %v155 = vld [vmem:[%s1 + $0x358] sm:$0xff]
    %v156 = vld [vmem:[%s1 + $0x360] sm:$0xff]
    %v157 = vld [vmem:[%s1 + $0x368] sm:$0xff]
    %v158 = vld [vmem:[%s1 + $0x370] sm:$0xff]
    %v159 = vld [vmem:[%s1 + $0x378] sm:$0xff]
    %v272 = vunpack.c.l.b16 %v48
    %v273 = vunpack.c.h.b16 %v48
    %v274 = vunpack.c.l.b16 %v49
    %v275 = vunpack.c.h.b16 %v49
    %v276 = vunpack.c.l.b16 %v50
    %v277 = vunpack.c.h.b16 %v50
    %v278 = vunpack.c.l.b16 %v51
    %v279 = vunpack.c.h.b16 %v51
    %v280 = vunpack.c.l.b16 %v52
    %v281 = vunpack.c.h.b16 %v52
    %v282 = vunpack.c.l.b16 %v53
    %v283 = vunpack.c.h.b16 %v53
    %v284 = vunpack.c.l.b16 %v54
    %v285 = vunpack.c.h.b16 %v54
    %v286 = vunpack.c.l.b16 %v55
    %v287 = vunpack.c.h.b16 %v55
    %v288 = vunpack.c.l.b16 %v56
    %v289 = vunpack.c.h.b16 %v56
    %v290 = vunpack.c.l.b16 %v57
    %v291 = vunpack.c.h.b16 %v57
    %v292 = vunpack.c.l.b16 %v58
    %v293 = vunpack.c.h.b16 %v58
    %v294 = vunpack.c.l.b16 %v59
    %v295 = vunpack.c.h.b16 %v59
    %v296 = vunpack.c.l.b16 %v60
    %v297 = vunpack.c.h.b16 %v60
    %v298 = vunpack.c.l.b16 %v61
    %v299 = vunpack.c.h.b16 %v61
    %v300 = vunpack.c.l.b16 %v62
    %v301 = vunpack.c.h.b16 %v62
    %v302 = vunpack.c.l.b16 %v63
    %v303 = vunpack.c.h.b16 %v63
    %v304 = vunpack.c.l.b16 %v64
    %v305 = vunpack.c.h.b16 %v64
    %v306 = vunpack.c.l.b16 %v65
    %v307 = vunpack.c.h.b16 %v65
    %v308 = vunpack.c.l.b16 %v66
    %v309 = vunpack.c.h.b16 %v66
    %v310 = vunpack.c.l.b16 %v67
    %v311 = vunpack.c.h.b16 %v67
    %v312 = vunpack.c.l.b16 %v68
    %v313 = vunpack.c.h.b16 %v68
    %v314 = vunpack.c.l.b16 %v69
    %v315 = vunpack.c.h.b16 %v69
    %v316 = vunpack.c.l.b16 %v70
    %v317 = vunpack.c.h.b16 %v70
    %v318 = vunpack.c.l.b16 %v71
    %v319 = vunpack.c.h.b16 %v71
    %v320 = vunpack.c.l.b16 %v72
    %v321 = vunpack.c.h.b16 %v72
    %v322 = vunpack.c.l.b16 %v73
    %v323 = vunpack.c.h.b16 %v73
    %v324 = vunpack.c.l.b16 %v74
    %v325 = vunpack.c.h.b16 %v74
    %v326 = vunpack.c.l.b16 %v75
    %v327 = vunpack.c.h.b16 %v75
    %v328 = vunpack.c.l.b16 %v76
    %v329 = vunpack.c.h.b16 %v76
    %v330 = vunpack.c.l.b16 %v77
    %v331 = vunpack.c.h.b16 %v77
    %v332 = vunpack.c.l.b16 %v78
    %v333 = vunpack.c.h.b16 %v78
    %v334 = vunpack.c.l.b16 %v79
    %v335 = vunpack.c.h.b16 %v79
    %v336 = vunpack.c.l.b16 %v80
    %v337 = vunpack.c.h.b16 %v80
    %v338 = vunpack.c.l.b16 %v81
    %v339 = vunpack.c.h.b16 %v81
    %v340 = vunpack.c.l.b16 %v82
    %v341 = vunpack.c.h.b16 %v82
    %v342 = vunpack.c.l.b16 %v83
    %v343 = vunpack.c.h.b16 %v83
    %v344 = vunpack.c.l.b16 %v84
    %v345 = vunpack.c.h.b16 %v84
    %v346 = vunpack.c.l.b16 %v85
    %v347 = vunpack.c.h.b16 %v85
    %v348 = vunpack.c.l.b16 %v86
    %v349 = vunpack.c.h.b16 %v86
    %v350 = vunpack.c.l.b16 %v87
    %v351 = vunpack.c.h.b16 %v87
    %v352 = vunpack.c.l.b16 %v88
    %v353 = vunpack.c.h.b16 %v88
    %v354 = vunpack.c.l.b16 %v89
    %v355 = vunpack.c.h.b16 %v89
    %v356 = vunpack.c.l.b16 %v90
    %v357 = vunpack.c.h.b16 %v90
    %v358 = vunpack.c.l.b16 %v91
    %v359 = vunpack.c.h.b16 %v91
    %v360 = vunpack.c.l.b16 %v92
    %v361 = vunpack.c.h.b16 %v92
    %v362 = vunpack.c.l.b16 %v93
    %v363 = vunpack.c.h.b16 %v93
    %v364 = vunpack.c.l.b16 %v94
    %v365 = vunpack.c.h.b16 %v94
    %v366 = vunpack.c.l.b16 %v95
    %v367 = vunpack.c.h.b16 %v95
    %v368 = vunpack.c.l.b16 %v96
    %v369 = vunpack.c.h.b16 %v96
    %v370 = vunpack.c.l.b16 %v97
    %v371 = vunpack.c.h.b16 %v97
    %v372 = vunpack.c.l.b16 %v98
    %v373 = vunpack.c.h.b16 %v98
    %v374 = vunpack.c.l.b16 %v99
    %v375 = vunpack.c.h.b16 %v99
    %v376 = vunpack.c.l.b16 %v100
    %v377 = vunpack.c.h.b16 %v100
    %v378 = vunpack.c.l.b16 %v101
    %v379 = vunpack.c.h.b16 %v101
    %v380 = vunpack.c.l.b16 %v102
    %v381 = vunpack.c.h.b16 %v102
    %v382 = vunpack.c.l.b16 %v103
    %v383 = vunpack.c.h.b16 %v103
    %v384 = vunpack.c.l.b16 %v104
    %v385 = vunpack.c.h.b16 %v104
    %v386 = vunpack.c.l.b16 %v105
    %v387 = vunpack.c.h.b16 %v105
    %v388 = vunpack.c.l.b16 %v106
    %v389 = vunpack.c.h.b16 %v106
    %v390 = vunpack.c.l.b16 %v107
    %v391 = vunpack.c.h.b16 %v107
    %v392 = vunpack.c.l.b16 %v108
    %v393 = vunpack.c.h.b16 %v108
    %v394 = vunpack.c.l.b16 %v109
    %v395 = vunpack.c.h.b16 %v109
    %v396 = vunpack.c.l.b16 %v110
    %v397 = vunpack.c.h.b16 %v110
    %v398 = vunpack.c.l.b16 %v111
    %v399 = vunpack.c.h.b16 %v111
    %v400 = vunpack.c.l.b16 %v112
    %v401 = vunpack.c.h.b16 %v112
    %v402 = vunpack.c.l.b16 %v113
    %v403 = vunpack.c.h.b16 %v113
    %v404 = vunpack.c.l.b16 %v114
    %v405 = vunpack.c.h.b16 %v114
    %v406 = vunpack.c.l.b16 %v115
    %v407 = vunpack.c.h.b16 %v115
    %v408 = vunpack.c.l.b16 %v116
    %v409 = vunpack.c.h.b16 %v116
    %v410 = vunpack.c.l.b16 %v117
    %v411 = vunpack.c.h.b16 %v117
    %v412 = vunpack.c.l.b16 %v118
    %v413 = vunpack.c.h.b16 %v118
    %v414 = vunpack.c.l.b16 %v119
    %v415 = vunpack.c.h.b16 %v119
    %v416 = vunpack.c.l.b16 %v120
    %v417 = vunpack.c.h.b16 %v120
    %v418 = vunpack.c.l.b16 %v121
    %v419 = vunpack.c.h.b16 %v121
    %v420 = vunpack.c.l.b16 %v122
    %v421 = vunpack.c.h.b16 %v122
    %v422 = vunpack.c.l.b16 %v123
    %v423 = vunpack.c.h.b16 %v123
    %v424 = vunpack.c.l.b16 %v124
    %v425 = vunpack.c.h.b16 %v124
    %v426 = vunpack.c.l.b16 %v125
    %v427 = vunpack.c.h.b16 %v125
    %v428 = vunpack.c.l.b16 %v126
    %v429 = vunpack.c.h.b16 %v126
    %v430 = vunpack.c.l.b16 %v127
    %v431 = vunpack.c.h.b16 %v127
    %v432 = vunpack.c.l.b16 %v128
    %v433 = vunpack.c.h.b16 %v128
    %v434 = vunpack.c.l.b16 %v129
    %v435 = vunpack.c.h.b16 %v129
    %v436 = vunpack.c.l.b16 %v130
    %v437 = vunpack.c.h.b16 %v130
    %v438 = vunpack.c.l.b16 %v131
    %v439 = vunpack.c.h.b16 %v131
    %v440 = vunpack.c.l.b16 %v132
    %v441 = vunpack.c.h.b16 %v132
    %v442 = vunpack.c.l.b16 %v133
    %v443 = vunpack.c.h.b16 %v133
    %v444 = vunpack.c.l.b16 %v134
    %v445 = vunpack.c.h.b16 %v134
    %v446 = vunpack.c.l.b16 %v135
    %v447 = vunpack.c.h.b16 %v135
    %v448 = vunpack.c.l.b16 %v136
    %v449 = vunpack.c.h.b16 %v136
    %v450 = vunpack.c.l.b16 %v137
    %v451 = vunpack.c.h.b16 %v137
    %v452 = vunpack.c.l.b16 %v138
    %v453 = vunpack.c.h.b16 %v138
    %v454 = vunpack.c.l.b16 %v139
    %v455 = vunpack.c.h.b16 %v139
    %v456 = vunpack.c.l.b16 %v140
    %v457 = vunpack.c.h.b16 %v140
    %v458 = vunpack.c.l.b16 %v141
    %v459 = vunpack.c.h.b16 %v141
    %v460 = vunpack.c.l.b16 %v142
    %v461 = vunpack.c.h.b16 %v142
    %v462 = vunpack.c.l.b16 %v143
    %v463 = vunpack.c.h.b16 %v143
    %v464 = vunpack.c.l.b16 %v144
    %v465 = vunpack.c.h.b16 %v144
    %v466 = vunpack.c.l.b16 %v145
    %v467 = vunpack.c.h.b16 %v145
    %v468 = vunpack.c.l.b16 %v146
    %v469 = vunpack.c.h.b16 %v146
    %v470 = vunpack.c.l.b16 %v147
    %v471 = vunpack.c.h.b16 %v147
    %v472 = vunpack.c.l.b16 %v148
    %v473 = vunpack.c.h.b16 %v148
    %v474 = vunpack.c.l.b16 %v149
    %v475 = vunpack.c.h.b16 %v149
    %v476 = vunpack.c.l.b16 %v150
    %v477 = vunpack.c.h.b16 %v150
    %v478 = vunpack.c.l.b16 %v151
    %v479 = vunpack.c.h.b16 %v151
    %v480 = vunpack.c.l.b16 %v152
    %v481 = vunpack.c.h.b16 %v152
    %v482 = vunpack.c.l.b16 %v153
    %v483 = vunpack.c.h.b16 %v153
    %v484 = vunpack.c.l.b16 %v154
    %v485 = vunpack.c.h.b16 %v154
    %v486 = vunpack.c.l.b16 %v155
    %v487 = vunpack.c.h.b16 %v155
    %v488 = vunpack.c.l.b16 %v156
    %v489 = vunpack.c.h.b16 %v156
    %v490 = vunpack.c.l.b16 %v157
    %v491 = vunpack.c.h.b16 %v157
    %v492 = vunpack.c.l.b16 %v158
    %v493 = vunpack.c.h.b16 %v158
    %v494 = vunpack.c.l.b16 %v159
    %v495 = vunpack.c.h.b16 %v159
    %v496 = vpack.c.b16 %v274, %v272
    %v497 = vpack.c.b16 %v275, %v273
    %v498 = vpack.c.b16 %v278, %v276
    %v499 = vpack.c.b16 %v279, %v277
    %v500 = vpack.c.b16 %v282, %v280
    %v501 = vpack.c.b16 %v283, %v281
    %v502 = vpack.c.b16 %v286, %v284
    %v503 = vpack.c.b16 %v287, %v285
    %v504 = vpack.c.b16 %v290, %v288
    %v505 = vpack.c.b16 %v291, %v289
    %v506 = vpack.c.b16 %v294, %v292
    %v507 = vpack.c.b16 %v295, %v293
    %v508 = vpack.c.b16 %v298, %v296
    %v509 = vpack.c.b16 %v299, %v297
    %v510 = vpack.c.b16 %v302, %v300
    %v511 = vpack.c.b16 %v303, %v301
    %v512 = vpack.c.b16 %v306, %v304
    %v513 = vpack.c.b16 %v307, %v305
    %v514 = vpack.c.b16 %v310, %v308
    %v515 = vpack.c.b16 %v311, %v309
    %v516 = vpack.c.b16 %v314, %v312
    %v517 = vpack.c.b16 %v315, %v313
    %v518 = vpack.c.b16 %v318, %v316
    %v519 = vpack.c.b16 %v319, %v317
    %v520 = vpack.c.b16 %v322, %v320
    %v521 = vpack.c.b16 %v323, %v321
    %v522 = vpack.c.b16 %v326, %v324
    %v523 = vpack.c.b16 %v327, %v325
    %v524 = vpack.c.b16 %v330, %v328
    %v525 = vpack.c.b16 %v331, %v329
    %v526 = vpack.c.b16 %v334, %v332
    %v527 = vpack.c.b16 %v335, %v333
    %v528 = vpack.c.b16 %v338, %v336
    %v529 = vpack.c.b16 %v339, %v337
    %v530 = vpack.c.b16 %v342, %v340
    %v531 = vpack.c.b16 %v343, %v341
    %v532 = vpack.c.b16 %v346, %v344
    %v533 = vpack.c.b16 %v347, %v345
    %v534 = vpack.c.b16 %v350, %v348
    %v535 = vpack.c.b16 %v351, %v349
    %v536 = vpack.c.b16 %v354, %v352
    %v537 = vpack.c.b16 %v355, %v353
    %v538 = vpack.c.b16 %v358, %v356
    %v539 = vpack.c.b16 %v359, %v357
    %v540 = vpack.c.b16 %v362, %v360
    %v541 = vpack.c.b16 %v363, %v361
    %v542 = vpack.c.b16 %v366, %v364
    %v543 = vpack.c.b16 %v367, %v365
    %v544 = vpack.c.b16 %v370, %v368
    %v545 = vpack.c.b16 %v371, %v369
    %v546 = vpack.c.b16 %v374, %v372
    %v547 = vpack.c.b16 %v375, %v373
    %v548 = vpack.c.b16 %v378, %v376
    %v549 = vpack.c.b16 %v379, %v377
    %v550 = vpack.c.b16 %v382, %v380
    %v551 = vpack.c.b16 %v383, %v381
    %v552 = vpack.c.b16 %v386, %v384
    %v553 = vpack.c.b16 %v387, %v385
    %v554 = vpack.c.b16 %v390, %v388
    %v555 = vpack.c.b16 %v391, %v389
    %v556 = vpack.c.b16 %v394, %v392
    %v557 = vpack.c.b16 %v395, %v393
    %v558 = vpack.c.b16 %v398, %v396
    %v559 = vpack.c.b16 %v399, %v397
    %v560 = vpack.c.b16 %v402, %v400
    %v561 = vpack.c.b16 %v403, %v401
    %v562 = vpack.c.b16 %v406, %v404
    %v563 = vpack.c.b16 %v407, %v405
    %v564 = vpack.c.b16 %v410, %v408
    %v565 = vpack.c.b16 %v411, %v409
    %v566 = vpack.c.b16 %v414, %v412
    %v567 = vpack.c.b16 %v415, %v413
    %v568 = vpack.c.b16 %v418, %v416
    %v569 = vpack.c.b16 %v419, %v417
    %v570 = vpack.c.b16 %v422, %v420
    %v571 = vpack.c.b16 %v423, %v421
    %v572 = vpack.c.b16 %v426, %v424
    %v573 = vpack.c.b16 %v427, %v425
    %v574 = vpack.c.b16 %v430, %v428
    %v575 = vpack.c.b16 %v431, %v429
    %v576 = vpack.c.b16 %v434, %v432
    %v577 = vpack.c.b16 %v435, %v433
    %v578 = vpack.c.b16 %v438, %v436
    %v579 = vpack.c.b16 %v439, %v437
    %v580 = vpack.c.b16 %v442, %v440
    %v581 = vpack.c.b16 %v443, %v441
    %v582 = vpack.c.b16 %v446, %v444
    %v583 = vpack.c.b16 %v447, %v445
    %v584 = vpack.c.b16 %v450, %v448
    %v585 = vpack.c.b16 %v451, %v449
    %v586 = vpack.c.b16 %v454, %v452
    %v587 = vpack.c.b16 %v455, %v453
    %v588 = vpack.c.b16 %v458, %v456
    %v589 = vpack.c.b16 %v459, %v457
    %v590 = vpack.c.b16 %v462, %v460
    %v591 = vpack.c.b16 %v463, %v461
    %v592 = vpack.c.b16 %v466, %v464
    %v593 = vpack.c.b16 %v467, %v465
    %v594 = vpack.c.b16 %v470, %v468
    %v595 = vpack.c.b16 %v471, %v469
    %v596 = vpack.c.b16 %v474, %v472
    %v597 = vpack.c.b16 %v475, %v473
    %v598 = vpack.c.b16 %v478, %v476
    %v599 = vpack.c.b16 %v479, %v477
    %v600 = vpack.c.b16 %v482, %v480
    %v601 = vpack.c.b16 %v483, %v481
    %v602 = vpack.c.b16 %v486, %v484
    %v603 = vpack.c.b16 %v487, %v485
    %v604 = vpack.c.b16 %v490, %v488
    %v605 = vpack.c.b16 %v491, %v489
    %v606 = vpack.c.b16 %v494, %v492
    %v607 = vpack.c.b16 %v495, %v493
    %720 = vmatprep.subr.bf16.mxu0 %v497
    %721 = vmatpush1.bf16.msra.mxu0 %v496
    %722 = vmatprep.subr.bf16.mxu0 %v499
    %723 = vmatpush1.bf16.msra.mxu0 %v498
    %724 = vmatprep.subr.bf16.mxu0 %v501
    %725 = vmatpush1.bf16.msra.mxu0 %v500
    %726 = vmatprep.subr.bf16.mxu0 %v503
    %727 = vmatpush1.bf16.msra.mxu0 %v502
    %728 = vmatprep.subr.bf16.mxu0 %v505
    %729 = vmatpush1.bf16.msra.mxu0 %v504
    %730 = vmatprep.subr.bf16.mxu0 %v507
    %731 = vmatpush1.bf16.msra.mxu0 %v506
    %732 = vmatprep.subr.bf16.mxu0 %v509
    %733 = vmatpush1.bf16.msra.mxu0 %v508
    %734 = vmatprep.subr.bf16.mxu0 %v511
    %735 = vmatpush1.bf16.msra.mxu0 %v510
    %736 = vmatprep.subr.bf16.mxu0 %v513
    %737 = vmatpush1.bf16.msra.mxu0 %v512
    %738 = vmatprep.subr.bf16.mxu0 %v515
    %739 = vmatpush1.bf16.msra.mxu0 %v514
    %740 = vmatprep.subr.bf16.mxu0 %v517
    %741 = vmatpush1.bf16.msra.mxu0 %v516
    %742 = vmatprep.subr.bf16.mxu0 %v519
    %743 = vmatpush1.bf16.msra.mxu0 %v518
    %744 = vmatprep.subr.bf16.mxu0 %v521
    %745 = vmatpush1.bf16.msra.mxu0 %v520
    %746 = vmatprep.subr.bf16.mxu0 %v523
    %747 = vmatpush1.bf16.msra.mxu0 %v522
    %748 = vmatprep.subr.bf16.mxu0 %v525
    %749 = vmatpush1.bf16.msra.mxu0 %v524
    %750 = vmatprep.subr.bf16.mxu0 %v527
    %751 = vmatpush1.bf16.msra.mxu0 %v526
    %752 = vmatprep.mubr.bf16.mxu0 %v31
    %753 = vmatmul.mubr.bf16.gmra.mrb[0].mxu0 %v24
    %v754 = vpop.f32.mrb[0].mxu0
    %v755 = vadd.f32 0.0, %v754
    %v756 = vpop.f32.mrb[0].mxu0
    %v757 = vadd.f32 0.0, %v756
    %v758 = vpop.f32.mrb[0].mxu0
    %v759 = vadd.f32 0.0, %v758
    %v760 = vpop.f32.mrb[0].mxu0
    %v761 = vadd.f32 0.0, %v760
    %762 = vdwg.mxu0
    %763 = vmatprep.subr.bf16.mxu0 %v529
    %764 = vmatpush1.bf16.msra.mxu0 %v528
    %765 = vmatprep.subr.bf16.mxu0 %v531
    %766 = vmatpush1.bf16.msra.mxu0 %v530
    %767 = vmatprep.subr.bf16.mxu0 %v533
    %768 = vmatpush1.bf16.msra.mxu0 %v532
    %769 = vmatprep.subr.bf16.mxu0 %v535
    %770 = vmatpush1.bf16.msra.mxu0 %v534
    %771 = vmatprep.subr.bf16.mxu0 %v537
    %772 = vmatpush1.bf16.msra.mxu0 %v536
    %773 = vmatprep.subr.bf16.mxu0 %v539
    %774 = vmatpush1.bf16.msra.mxu0 %v538
    %775 = vmatprep.subr.bf16.mxu0 %v541
    %776 = vmatpush1.bf16.msra.mxu0 %v540
    %777 = vmatprep.subr.bf16.mxu0 %v543
    %778 = vmatpush1.bf16.msra.mxu0 %v542
    %779 = vmatprep.subr.bf16.mxu0 %v545
    %780 = vmatpush1.bf16.msra.mxu0 %v544
    %781 = vmatprep.subr.bf16.mxu0 %v547
    %782 = vmatpush1.bf16.msra.mxu0 %v546
    %783 = vmatprep.subr.bf16.mxu0 %v549
    %784 = vmatpush1.bf16.msra.mxu0 %v548
    %785 = vmatprep.subr.bf16.mxu0 %v551
    %786 = vmatpush1.bf16.msra.mxu0 %v550
    %787 = vmatprep.subr.bf16.mxu0 %v553
    %788 = vmatpush1.bf16.msra.mxu0 %v552
    %789 = vmatprep.subr.bf16.mxu0 %v555
    %790 = vmatpush1.bf16.msra.mxu0 %v554
    %791 = vmatprep.subr.bf16.mxu0 %v557
    %792 = vmatpush1.bf16.msra.mxu0 %v556
    %793 = vmatprep.subr.bf16.mxu0 %v559
    %794 = vmatpush1.bf16.msra.mxu0 %v558
    %795 = vmatprep.mubr.bf16.mxu0 %v38
    %796 = vmatmul.mubr.bf16.gmra.mrb[0].mxu0 %v34
    %v797 = vpop.f32.mrb[0].mxu0
    %v798 = vadd.f32 %v755, %v797
    %v799 = vpop.f32.mrb[0].mxu0
    %v800 = vadd.f32 %v757, %v799
    %v801 = vpop.f32.mrb[0].mxu0
    %v802 = vadd.f32 %v759, %v801
    %v803 = vpop.f32.mrb[0].mxu0
    %v804 = vadd.f32 %v761, %v803
    %805 = vdwg.mxu0
    %806 = vmatprep.subr.bf16.mxu0 %v561
    %807 = vmatpush1.bf16.msra.mxu0 %v560
    %808 = vmatprep.subr.bf16.mxu0 %v563
    %809 = vmatpush1.bf16.msra.mxu0 %v562
    %810 = vmatprep.subr.bf16.mxu0 %v565
    %811 = vmatpush1.bf16.msra.mxu0 %v564
    %812 = vmatprep.subr.bf16.mxu0 %v567
    %813 = vmatpush1.bf16.msra.mxu0 %v566
    %814 = vmatprep.subr.bf16.mxu0 %v569
    %815 = vmatpush1.bf16.msra.mxu0 %v568
    %816 = vmatprep.subr.bf16.mxu0 %v571
    %817 = vmatpush1.bf16.msra.mxu0 %v570
    %818 = vmatprep.subr.bf16.mxu0 %v573
    %819 = vmatpush1.bf16.msra.mxu0 %v572
    %820 = vmatprep.subr.bf16.mxu0 %v575
    %821 = vmatpush1.bf16.msra.mxu0 %v574
    %822 = vmatprep.subr.bf16.mxu0 %v577
    %823 = vmatpush1.bf16.msra.mxu0 %v576
    %824 = vmatprep.subr.bf16.mxu0 %v579
    %825 = vmatpush1.bf16.msra.mxu0 %v578
    %826 = vmatprep.subr.bf16.mxu0 %v581
    %827 = vmatpush1.bf16.msra.mxu0 %v580
    %828 = vmatprep.subr.bf16.mxu0 %v583
    %829 = vmatpush1.bf16.msra.mxu0 %v582
    %830 = vmatprep.subr.bf16.mxu0 %v585
    %831 = vmatpush1.bf16.msra.mxu0 %v584
    %832 = vmatprep.subr.bf16.mxu0 %v587
    %833 = vmatpush1.bf16.msra.mxu0 %v586
    %834 = vmatprep.subr.bf16.mxu0 %v589
    %835 = vmatpush1.bf16.msra.mxu0 %v588
    %836 = vmatprep.subr.bf16.mxu0 %v591
    %837 = vmatpush1.bf16.msra.mxu0 %v590
    %838 = vmatprep.mubr.bf16.mxu0 %v44
    %839 = vmatmul.mubr.bf16.gmra.mrb[0].mxu0 %v40
    %v840 = vpop.f32.mrb[0].mxu0
    %v841 = vadd.f32 %v798, %v840
    %v842 = vpop.f32.mrb[0].mxu0
    %v843 = vadd.f32 %v800, %v842
    %v844 = vpop.f32.mrb[0].mxu0
    %v845 = vadd.f32 %v802, %v844
    %v846 = vpop.f32.mrb[0].mxu0
    %v847 = vadd.f32 %v804, %v846
    %848 = vdwg.mxu0
    %849 = vmatprep.subr.bf16.mxu0 %v593
    %850 = vmatpush1.bf16.msra.mxu0 %v592
    %851 = vmatprep.subr.bf16.mxu0 %v595
    %852 = vmatpush1.bf16.msra.mxu0 %v594
    %853 = vmatprep.subr.bf16.mxu0 %v597
    %854 = vmatpush1.bf16.msra.mxu0 %v596
    %855 = vmatprep.subr.bf16.mxu0 %v599
    %856 = vmatpush1.bf16.msra.mxu0 %v598
    %857 = vmatprep.subr.bf16.mxu0 %v601
    %858 = vmatpush1.bf16.msra.mxu0 %v600
    %859 = vmatprep.subr.bf16.mxu0 %v603
    %860 = vmatpush1.bf16.msra.mxu0 %v602
    %861 = vmatprep.subr.bf16.mxu0 %v605
    %862 = vmatpush1.bf16.msra.mxu0 %v604
    %863 = vmatprep.subr.bf16.mxu0 %v607
    %864 = vmatpush1.bf16.msra.mxu0 %v606
    %865 = vmatprep.subr.bf16.mxu0 0
    %866 = vmatpush1.bf16.msra.mxu0 0
    %867 = vmatprep.subr.bf16.mxu0 0
    %868 = vmatpush1.bf16.msra.mxu0 0
    %869 = vmatprep.subr.bf16.mxu0 0
    %870 = vmatpush1.bf16.msra.mxu0 0
    %871 = vmatprep.subr.bf16.mxu0 0
    %872 = vmatpush1.bf16.msra.mxu0 0
    %873 = vmatprep.subr.bf16.mxu0 0
    %874 = vmatpush1.bf16.msra.mxu0 0
    %875 = vmatprep.subr.bf16.mxu0 0
    %876 = vmatpush1.bf16.msra.mxu0 0
    %877 = vmatprep.subr.bf16.mxu0 0
    %878 = vmatpush1.bf16.msra.mxu0 0
    %879 = vmatprep.subr.bf16.mxu0 0
    %880 = vmatpush1.bf16.msra.mxu0 0
    %881 = vmatprep.mubr.bf16.mxu0 0
    %882 = vmatmul.mubr.bf16.gmra.mrb[0].mxu0 %v46
    %v883 = vpop.f32.mrb[0].mxu0
    %v884 = vadd.f32 %v841, %v883
    %v885 = vpop.f32.mrb[0].mxu0
    %v886 = vadd.f32 %v843, %v885
    %v887 = vpop.f32.mrb[0].mxu0
    %v888 = vadd.f32 %v845, %v887
    %v889 = vpop.f32.mrb[0].mxu0
    %v890 = vadd.f32 %v847, %v889
    %891 = vdwg.mxu0
    %v892 = vld [vmem:[%s4] sm:$0xff]
    %v893 = vld [vmem:[%s4 + $0x8] sm:$0xff]
    %v894 = vld [vmem:[%s4 + $0x10] sm:$0x3]
    %v895 = vld [vmem:[%s4 + $0x18] sm:$0x3]
    %v896 = vmul.f32 %v884, %v892
    %v897 = vmul.f32 %v886, %v893
    %v898 = vmul.f32 %v888, %v894
    %v899 = vmul.f32 %v890, %v895
    %v900 = vld [vmem:[%s4 + $0x10] sm:$0xfc]
    %v901 = vld [vmem:[%s4 + $0x18] sm:$0xfc]
    %v902 = vld [vmem:[%s4 + $0x20] sm:$0xf]
    %v903 = vld [vmem:[%s4 + $0x28] sm:$0xf]
    %vm908 = vcmask 1045504
    %v909 = vrot.slane %v900, 2
    %v910 = vrot.slane %v902, 2
    %v911 = vsel %vm908, %v909, %v910
    %v912 = vrot.slane %v901, 2
    %v913 = vrot.slane %v903, 2
    %v914 = vsel %vm908, %v912, %v913
    %v919 = vadd.f32 %v896, %v911
    %v920 = vadd.f32 %v897, %v914
    %v921 = vadd.f32 %v898, %v910
    %v922 = vadd.f32 %v899, %v913
    %v923 = vmax.f32 %v919, 0.0
    %v924 = vmax.f32 %v920, 0.0
    %v925 = vmax.f32 %v921, 0.0
    %v926 = vmax.f32 %v922, 0.0
    %v927 = vpack.c.bf16 %v925, %v923
    %v928 = vpack.c.bf16 %v926, %v924
    %v930 = vshrl.u32 %v927, 16
    %v932 = vshll.u32 %v927, 16
    %v934 = vrot.slane %v932, 1
    %v935 = vor.u32 %v930, %v934
    %v937 = vshrl.u32 %v928, 16
    %v939 = vshll.u32 %v928, 16
    %v941 = vrot.slane %v939, 1
    %v942 = vor.u32 %v937, %v941
    %943 = vrot.lane.b32.xlu0 %v935, 32
    %v944 = vpop.permute.xlu0 %943
    %945 = vrot.lane.b32.xlu0 %v942, 32
    %v946 = vpop.permute.xlu0 %945
    %vm947 = vcmask 261120
    %v948 = vsel %vm947, %v944, %v946
    %v951 = vrot.slane %v927, 1
    %v952 = vrot.slane %v928, 1
    %953 = vrot.lane.b32.xlu0 %v951, 64
    %v954 = vpop.permute.xlu0 %953
    %955 = vrot.lane.b32.xlu0 %v952, 64
    %v956 = vpop.permute.xlu0 %955
    %vm957 = vcmask 523264
    %v958 = vsel %vm957, %v954, %v956
    %v959 = vrot.slane %v930, 1
    %v960 = vrot.slane %v932, 2
    %v961 = vor.u32 %v959, %v960
    %v962 = vrot.slane %v937, 1
    %v963 = vrot.slane %v939, 2
    %v964 = vor.u32 %v962, %v963
    %965 = vrot.lane.b32.xlu0 %v961, 96
    %v966 = vpop.permute.xlu0 %965
    %967 = vrot.lane.b32.xlu0 %v964, 96
    %v968 = vpop.permute.xlu0 %967
    %vm969 = vcmask 785408
    %v970 = vsel %vm969, %v966, %v968
    %v972 = vrot.slane %v927, 2
    %v973 = vrot.slane %v928, 2
    %vm975 = vcmask 261120
    %v977 = vsel %vm975, %v928, %v944
    %vm979 = vcmask 523264
    %v982 = vsel %vm979, %v948, %v954
    %vm984 = vcmask 785408
    %v987 = vsel %vm984, %v958, %v966
    %v989 = vld [vmem:[%s2] sm:$0xf]
    %v990 = vld [vmem:[%s2 + $0x4] sm:$0xf]
    %v991 = vld [vmem:[%s2 + $0x8] sm:$0xf]
    %v992 = vld [vmem:[%s2 + $0xc] sm:$0xf]
    %v993 = vld [vmem:[%s2 + $0x10] sm:$0xf]
    %v994 = vld [vmem:[%s2 + $0x14] sm:$0xf]
    %v995 = vld [vmem:[%s2 + $0x18] sm:$0xf]
    %v996 = vld [vmem:[%s2 + $0x1c] sm:$0xf]
    %v997 = vld [vmem:[%s2 + $0x20] sm:$0xf]
    %v998 = vld [vmem:[%s2 + $0x24] sm:$0xf]
    %v999 = vld [vmem:[%s2 + $0x28] sm:$0xf]
    %v1000 = vld [vmem:[%s2 + $0x2c] sm:$0xf]
    %v1001 = vld [vmem:[%s2 + $0x30] sm:$0xf]
    %v1002 = vld [vmem:[%s2 + $0x34] sm:$0xf]
    %v1003 = vld [vmem:[%s2 + $0x38] sm:$0xf]
    %v1004 = vld [vmem:[%s2 + $0x3c] sm:$0xf]
    %v1005 = vld [vmem:[%s2 + $0x40] sm:$0xf]
    %v1006 = vld [vmem:[%s2 + $0x44] sm:$0xf]
    %v1007 = vld [vmem:[%s2 + $0x48] sm:$0xf]
    %v1008 = vld [vmem:[%s2 + $0x4c] sm:$0xf]
    %v1009 = vld [vmem:[%s2 + $0x50] sm:$0xf]
    %v1010 = vld [vmem:[%s2 + $0x54] sm:$0xf]
    %v1011 = vld [vmem:[%s2 + $0x58] sm:$0xf]
    %v1012 = vld [vmem:[%s2 + $0x5c] sm:$0xf]
    %v1013 = vld [vmem:[%s2 + $0x60] sm:$0xf]
    %v1014 = vld [vmem:[%s2 + $0x64] sm:$0xf]
    %v1015 = vld [vmem:[%s2 + $0x68] sm:$0xf]
    %v1016 = vld [vmem:[%s2 + $0x6c] sm:$0xf]
    %v1017 = vld [vmem:[%s2 + $0x70] sm:$0xf]
    %v1018 = vld [vmem:[%s2 + $0x74] sm:$0xf]
    %v1019 = vld [vmem:[%s2 + $0x78] sm:$0xf]
    %v1020 = vld [vmem:[%s2 + $0x7c] sm:$0xf]
    %v1021 = vld [vmem:[%s2 + $0x80] sm:$0xf]
    %v1022 = vld [vmem:[%s2 + $0x84] sm:$0xf]
    %v1023 = vld [vmem:[%s2 + $0x88] sm:$0xf]
    %v1024 = vld [vmem:[%s2 + $0x8c] sm:$0xf]
    %v1025 = vld [vmem:[%s2 + $0x90] sm:$0xf]
    %v1026 = vld [vmem:[%s2 + $0x94] sm:$0xf]
    %v1027 = vld [vmem:[%s2 + $0x98] sm:$0xf]
    %v1028 = vld [vmem:[%s2 + $0x9c] sm:$0xf]
    %v1029 = vld [vmem:[%s2 + $0xa0] sm:$0xf]
    %v1030 = vld [vmem:[%s2 + $0xa4] sm:$0xf]
    %v1031 = vld [vmem:[%s2 + $0xa8] sm:$0xf]
    %v1032 = vld [vmem:[%s2 + $0xac] sm:$0xf]
    %v1033 = vld [vmem:[%s2 + $0xb0] sm:$0xf]
    %v1034 = vld [vmem:[%s2 + $0xb4] sm:$0xf]
    %v1035 = vld [vmem:[%s2 + $0xb8] sm:$0xf]
    %v1036 = vld [vmem:[%s2 + $0xbc] sm:$0xf]
    %v1037 = vld [vmem:[%s2 + $0xc0] sm:$0xf]
    %v1038 = vld [vmem:[%s2 + $0xc4] sm:$0xf]
    %v1039 = vld [vmem:[%s2 + $0xc8] sm:$0xf]
    %v1040 = vld [vmem:[%s2 + $0xcc] sm:$0xf]
    %v1041 = vld [vmem:[%s2 + $0xd0] sm:$0xf]
    %v1042 = vld [vmem:[%s2 + $0xd4] sm:$0xf]
    %v1043 = vld [vmem:[%s2 + $0xd8] sm:$0xf]
    %v1044 = vld [vmem:[%s2 + $0xdc] sm:$0xf]
    %v1045 = vld [vmem:[%s2 + $0xe0] sm:$0xf]
    %v1046 = vld [vmem:[%s2 + $0xe4] sm:$0xf]
    %v1047 = vld [vmem:[%s2 + $0xe8] sm:$0xf]
    %v1048 = vld [vmem:[%s2 + $0xec] sm:$0xf]
    %v1049 = vld [vmem:[%s2 + $0xf0] sm:$0xf]
    %v1050 = vld [vmem:[%s2 + $0xf4] sm:$0xf]
    %v1051 = vld [vmem:[%s2 + $0xf8] sm:$0xf]
    %v1052 = vld [vmem:[%s2 + $0xfc] sm:$0xf]
    %v1053 = vld [vmem:[%s2 + $0x100] sm:$0xf]
    %v1054 = vld [vmem:[%s2 + $0x104] sm:$0xf]
    %v1055 = vld [vmem:[%s2 + $0x108] sm:$0xf]
    %v1056 = vld [vmem:[%s2 + $0x10c] sm:$0xf]
    %v1057 = vld [vmem:[%s2 + $0x110] sm:$0xf]
    %v1058 = vld [vmem:[%s2 + $0x114] sm:$0xf]
    %v1059 = vld [vmem:[%s2 + $0x118] sm:$0xf]
    %v1060 = vld [vmem:[%s2 + $0x11c] sm:$0xf]
    %v1061 = vld [vmem:[%s2 + $0x120] sm:$0xf]
    %v1062 = vld [vmem:[%s2 + $0x124] sm:$0xf]
    %v1063 = vld [vmem:[%s2 + $0x128] sm:$0xf]
    %v1064 = vld [vmem:[%s2 + $0x12c] sm:$0xf]
    %v1065 = vld [vmem:[%s2 + $0x130] sm:$0xf]
    %v1066 = vld [vmem:[%s2 + $0x134] sm:$0xf]
    %v1067 = vld [vmem:[%s2 + $0x138] sm:$0xf]
    %v1068 = vld [vmem:[%s2 + $0x13c] sm:$0xf]
    %v1069 = vld [vmem:[%s2 + $0x140] sm:$0xf]
    %v1070 = vld [vmem:[%s2 + $0x144] sm:$0xf]
    %v1071 = vld [vmem:[%s2 + $0x148] sm:$0xf]
    %v1072 = vld [vmem:[%s2 + $0x14c] sm:$0xf]
    %v1073 = vld [vmem:[%s2 + $0x150] sm:$0xf]
    %v1074 = vld [vmem:[%s2 + $0x154] sm:$0xf]
    %v1075 = vld [vmem:[%s2 + $0x158] sm:$0xf]
    %v1076 = vld [vmem:[%s2 + $0x15c] sm:$0xf]
    %v1077 = vld [vmem:[%s2 + $0x160] sm:$0xf]
    %v1078 = vld [vmem:[%s2 + $0x164] sm:$0xf]
    %v1079 = vld [vmem:[%s2 + $0x168] sm:$0xf]
    %v1080 = vld [vmem:[%s2 + $0x16c] sm:$0xf]
    %v1081 = vld [vmem:[%s2 + $0x170] sm:$0xf]
    %v1082 = vld [vmem:[%s2 + $0x174] sm:$0xf]
    %v1083 = vld [vmem:[%s2 + $0x178] sm:$0xf]
    %v1084 = vld [vmem:[%s2 + $0x17c] sm:$0xf]
    %v1085 = vld [vmem:[%s2 + $0x180] sm:$0xf]
    %v1086 = vld [vmem:[%s2 + $0x184] sm:$0xf]
    %v1087 = vld [vmem:[%s2 + $0x188] sm:$0xf]
    %v1088 = vld [vmem:[%s2 + $0x18c] sm:$0xf]
    %v1189 = vunpack.c.l.b16 %v989
    %v1190 = vunpack.c.l.b16 %v990
    %v1191 = vunpack.c.l.b16 %v991
    %v1192 = vunpack.c.l.b16 %v992
    %v1193 = vunpack.c.l.b16 %v993
    %v1194 = vunpack.c.l.b16 %v994
    %v1195 = vunpack.c.l.b16 %v995
    %v1196 = vunpack.c.l.b16 %v996
    %v1197 = vunpack.c.l.b16 %v997
    %v1198 = vunpack.c.l.b16 %v998
    %v1199 = vunpack.c.l.b16 %v999
    %v1200 = vunpack.c.l.b16 %v1000
    %v1201 = vunpack.c.l.b16 %v1001
    %v1202 = vunpack.c.l.b16 %v1002
    %v1203 = vunpack.c.l.b16 %v1003
    %v1204 = vunpack.c.l.b16 %v1004
    %v1205 = vunpack.c.l.b16 %v1005
    %v1206 = vunpack.c.l.b16 %v1006
    %v1207 = vunpack.c.l.b16 %v1007
    %v1208 = vunpack.c.l.b16 %v1008
    %v1209 = vunpack.c.l.b16 %v1009
    %v1210 = vunpack.c.l.b16 %v1010
    %v1211 = vunpack.c.l.b16 %v1011
    %v1212 = vunpack.c.l.b16 %v1012
    %v1213 = vunpack.c.l.b16 %v1013
    %v1214 = vunpack.c.l.b16 %v1014
    %v1215 = vunpack.c.l.b16 %v1015
    %v1216 = vunpack.c.l.b16 %v1016
    %v1217 = vunpack.c.l.b16 %v1017
    %v1218 = vunpack.c.l.b16 %v1018
    %v1219 = vunpack.c.l.b16 %v1019
    %v1220 = vunpack.c.l.b16 %v1020
    %v1221 = vunpack.c.l.b16 %v1021
    %v1222 = vunpack.c.l.b16 %v1022
    %v1223 = vunpack.c.l.b16 %v1023
    %v1224 = vunpack.c.l.b16 %v1024
    %v1225 = vunpack.c.l.b16 %v1025
    %v1226 = vunpack.c.l.b16 %v1026
    %v1227 = vunpack.c.l.b16 %v1027
    %v1228 = vunpack.c.l.b16 %v1028
    %v1229 = vunpack.c.l.b16 %v1029
    %v1230 = vunpack.c.l.b16 %v1030
    %v1231 = vunpack.c.l.b16 %v1031
    %v1232 = vunpack.c.l.b16 %v1032
    %v1233 = vunpack.c.l.b16 %v1033
    %v1234 = vunpack.c.l.b16 %v1034
    %v1235 = vunpack.c.l.b16 %v1035
    %v1236 = vunpack.c.l.b16 %v1036
    %v1237 = vunpack.c.l.b16 %v1037
    %v1238 = vunpack.c.l.b16 %v1038
    %v1239 = vunpack.c.l.b16 %v1039
    %v1240 = vunpack.c.l.b16 %v1040
    %v1241 = vunpack.c.l.b16 %v1041
    %v1242 = vunpack.c.l.b16 %v1042
    %v1243 = vunpack.c.l.b16 %v1043
    %v1244 = vunpack.c.l.b16 %v1044
    %v1245 = vunpack.c.l.b16 %v1045
    %v1246 = vunpack.c.l.b16 %v1046
    %v1247 = vunpack.c.l.b16 %v1047
    %v1248 = vunpack.c.l.b16 %v1048
    %v1249 = vunpack.c.l.b16 %v1049
    %v1250 = vunpack.c.l.b16 %v1050
    %v1251 = vunpack.c.l.b16 %v1051
    %v1252 = vunpack.c.l.b16 %v1052
    %v1253 = vunpack.c.l.b16 %v1053
    %v1254 = vunpack.c.l.b16 %v1054
    %v1255 = vunpack.c.l.b16 %v1055
    %v1256 = vunpack.c.l.b16 %v1056
    %v1257 = vunpack.c.l.b16 %v1057
    %v1258 = vunpack.c.l.b16 %v1058
    %v1259 = vunpack.c.l.b16 %v1059
    %v1260 = vunpack.c.l.b16 %v1060
    %v1261 = vunpack.c.l.b16 %v1061
    %v1262 = vunpack.c.l.b16 %v1062
    %v1263 = vunpack.c.l.b16 %v1063
    %v1264 = vunpack.c.l.b16 %v1064
    %v1265 = vunpack.c.l.b16 %v1065
    %v1266 = vunpack.c.l.b16 %v1066
    %v1267 = vunpack.c.l.b16 %v1067
    %v1268 = vunpack.c.l.b16 %v1068
    %v1269 = vunpack.c.l.b16 %v1069
    %v1270 = vunpack.c.l.b16 %v1070
    %v1271 = vunpack.c.l.b16 %v1071
    %v1272 = vunpack.c.l.b16 %v1072
    %v1273 = vunpack.c.l.b16 %v1073
    %v1274 = vunpack.c.l.b16 %v1074
    %v1275 = vunpack.c.l.b16 %v1075
    %v1276 = vunpack.c.l.b16 %v1076
    %v1277 = vunpack.c.l.b16 %v1077
    %v1278 = vunpack.c.l.b16 %v1078
    %v1279 = vunpack.c.l.b16 %v1079
    %v1280 = vunpack.c.l.b16 %v1080
    %v1281 = vunpack.c.l.b16 %v1081
    %v1282 = vunpack.c.l.b16 %v1082
    %v1283 = vunpack.c.l.b16 %v1083
    %v1284 = vunpack.c.l.b16 %v1084
    %v1285 = vunpack.c.l.b16 %v1085
    %v1286 = vunpack.c.l.b16 %v1086
    %v1287 = vunpack.c.l.b16 %v1087
    %v1288 = vunpack.c.l.b16 %v1088
    %v1289 = vpack.c.b16 %v1190, %v1189
    %v1290 = vpack.c.b16 %v1192, %v1191
    %v1291 = vpack.c.b16 %v1194, %v1193
    %v1292 = vpack.c.b16 %v1196, %v1195
    %v1293 = vpack.c.b16 %v1198, %v1197
    %v1294 = vpack.c.b16 %v1200, %v1199
    %v1295 = vpack.c.b16 %v1202, %v1201
    %v1296 = vpack.c.b16 %v1204, %v1203
    %v1297 = vpack.c.b16 %v1206, %v1205
    %v1298 = vpack.c.b16 %v1208, %v1207
    %v1299 = vpack.c.b16 %v1210, %v1209
    %v1300 = vpack.c.b16 %v1212, %v1211
    %v1301 = vpack.c.b16 %v1214, %v1213
    %v1302 = vpack.c.b16 %v1216, %v1215
    %v1303 = vpack.c.b16 %v1218, %v1217
    %v1304 = vpack.c.b16 %v1220, %v1219
    %v1305 = vpack.c.b16 %v1222, %v1221
    %v1306 = vpack.c.b16 %v1224, %v1223
    %v1307 = vpack.c.b16 %v1226, %v1225
    %v1308 = vpack.c.b16 %v1228, %v1227
    %v1309 = vpack.c.b16 %v1230, %v1229
    %v1310 = vpack.c.b16 %v1232, %v1231
    %v1311 = vpack.c.b16 %v1234, %v1233
    %v1312 = vpack.c.b16 %v1236, %v1235
    %v1313 = vpack.c.b16 %v1238, %v1237
    %v1314 = vpack.c.b16 %v1240, %v1239
    %v1315 = vpack.c.b16 %v1242, %v1241
    %v1316 = vpack.c.b16 %v1244, %v1243
    %v1317 = vpack.c.b16 %v1246, %v1245
    %v1318 = vpack.c.b16 %v1248, %v1247
    %v1319 = vpack.c.b16 %v1250, %v1249
    %v1320 = vpack.c.b16 %v1252, %v1251
    %v1321 = vpack.c.b16 %v1254, %v1253
    %v1322 = vpack.c.b16 %v1256, %v1255
    %v1323 = vpack.c.b16 %v1258, %v1257
    %v1324 = vpack.c.b16 %v1260, %v1259
    %v1325 = vpack.c.b16 %v1262, %v1261
    %v1326 = vpack.c.b16 %v1264, %v1263
    %v1327 = vpack.c.b16 %v1266, %v1265
    %v1328 = vpack.c.b16 %v1268, %v1267
    %v1329 = vpack.c.b16 %v1270, %v1269
    %v1330 = vpack.c.b16 %v1272, %v1271
    %v1331 = vpack.c.b16 %v1274, %v1273
    %v1332 = vpack.c.b16 %v1276, %v1275
    %v1333 = vpack.c.b16 %v1278, %v1277
    %v1334 = vpack.c.b16 %v1280, %v1279
    %v1335 = vpack.c.b16 %v1282, %v1281
    %v1336 = vpack.c.b16 %v1284, %v1283
    %v1337 = vpack.c.b16 %v1286, %v1285
    %v1338 = vpack.c.b16 %v1288, %v1287
    %v1390 = vsel %vm975, %v973, 0
    %1392 = vmatprep.subr.bf16.mxu0 0
    %1393 = vmatpush1.bf16.msra.mxu0 %v1289
    %1394 = vmatprep.subr.bf16.mxu0 0
    %1395 = vmatpush1.bf16.msra.mxu0 %v1290
    %1396 = vmatprep.subr.bf16.mxu0 0
    %1397 = vmatpush1.bf16.msra.mxu0 %v1291
    %1398 = vmatprep.subr.bf16.mxu0 0
    %1399 = vmatpush1.bf16.msra.mxu0 %v1292
    %1400 = vmatprep.subr.bf16.mxu0 0
    %1401 = vmatpush1.bf16.msra.mxu0 %v1293
    %1402 = vmatprep.subr.bf16.mxu0 0
    %1403 = vmatpush1.bf16.msra.mxu0 %v1294
    %1404 = vmatprep.subr.bf16.mxu0 0
    %1405 = vmatpush1.bf16.msra.mxu0 %v1295
    %1406 = vmatprep.subr.bf16.mxu0 0
    %1407 = vmatpush1.bf16.msra.mxu0 %v1296
    %1408 = vmatprep.subr.bf16.mxu0 0
    %1409 = vmatpush1.bf16.msra.mxu0 %v1297
    %1410 = vmatprep.subr.bf16.mxu0 0
    %1411 = vmatpush1.bf16.msra.mxu0 %v1298
    %1412 = vmatprep.subr.bf16.mxu0 0
    %1413 = vmatpush1.bf16.msra.mxu0 %v1299
    %1414 = vmatprep.subr.bf16.mxu0 0
    %1415 = vmatpush1.bf16.msra.mxu0 %v1300
    %1416 = vmatprep.subr.bf16.mxu0 0
    %1417 = vmatpush1.bf16.msra.mxu0 %v1301
    %1418 = vmatprep.subr.bf16.mxu0 0
    %1419 = vmatpush1.bf16.msra.mxu0 %v1302
    %1420 = vmatprep.subr.bf16.mxu0 0
    %1421 = vmatpush1.bf16.msra.mxu0 %v1303
    %1422 = vmatprep.subr.bf16.mxu0 0
    %1423 = vmatpush1.bf16.msra.mxu0 %v1304
    %1424 = vmatprep.mubr.bf16.mxu0 %v977
    %1425 = vmatmul.mubr.bf16.gmra.mrb[0].mxu0 %v927
    %v1426 = vpop.f32.mrb[0].mxu0
    %v1427 = vadd.f32 0.0, %v1426
    %v1428 = vpop.f32.mrb[0].mxu0
    %v1429 = vpop.f32.mrb[0].mxu0
    %v1430 = vpop.f32.mrb[0].mxu0
    %1431 = vdwg.mxu0
    %1432 = vmatprep.subr.bf16.mxu0 0
    %1433 = vmatpush1.bf16.msra.mxu0 %v1305
    %1434 = vmatprep.subr.bf16.mxu0 0
    %1435 = vmatpush1.bf16.msra.mxu0 %v1306
    %1436 = vmatprep.subr.bf16.mxu0 0
    %1437 = vmatpush1.bf16.msra.mxu0 %v1307
    %1438 = vmatprep.subr.bf16.mxu0 0
    %1439 = vmatpush1.bf16.msra.mxu0 %v1308
    %1440 = vmatprep.subr.bf16.mxu0 0
    %1441 = vmatpush1.bf16.msra.mxu0 %v1309
    %1442 = vmatprep.subr.bf16.mxu0 0
    %1443 = vmatpush1.bf16.msra.mxu0 %v1310
    %1444 = vmatprep.subr.bf16.mxu0 0
    %1445 = vmatpush1.bf16.msra.mxu0 %v1311
    %1446 = vmatprep.subr.bf16.mxu0 0
    %1447 = vmatpush1.bf16.msra.mxu0 %v1312
    %1448 = vmatprep.subr.bf16.mxu0 0
    %1449 = vmatpush1.bf16.msra.mxu0 %v1313
    %1450 = vmatprep.subr.bf16.mxu0 0
    %1451 = vmatpush1.bf16.msra.mxu0 %v1314
    %1452 = vmatprep.subr.bf16.mxu0 0
    %1453 = vmatpush1.bf16.msra.mxu0 %v1315
    %1454 = vmatprep.subr.bf16.mxu0 0
    %1455 = vmatpush1.bf16.msra.mxu0 %v1316
    %1456 = vmatprep.subr.bf16.mxu0 0
    %1457 = vmatpush1.bf16.msra.mxu0 %v1317
    %1458 = vmatprep.subr.bf16.mxu0 0
    %1459 = vmatpush1.bf16.msra.mxu0 %v1318
    %1460 = vmatprep.subr.bf16.mxu0 0
    %1461 = vmatpush1.bf16.msra.mxu0 %v1319
    %1462 = vmatprep.subr.bf16.mxu0 0
    %1463 = vmatpush1.bf16.msra.mxu0 %v1320
    %1464 = vmatprep.mubr.bf16.mxu0 %v987
    %1465 = vmatmul.mubr.bf16.gmra.mrb[0].mxu0 %v982
    %v1466 = vpop.f32.mrb[0].mxu0
    %v1467 = vadd.f32 %v1427, %v1466
    %v1468 = vpop.f32.mrb[0].mxu0
    %v1469 = vpop.f32.mrb[0].mxu0
    %v1470 = vpop.f32.mrb[0].mxu0
    %1471 = vdwg.mxu0
    %1472 = vmatprep.subr.bf16.mxu0 0
    %1473 = vmatpush1.bf16.msra.mxu0 %v1321
    %1474 = vmatprep.subr.bf16.mxu0 0
    %1475 = vmatpush1.bf16.msra.mxu0 %v1322
    %1476 = vmatprep.subr.bf16.mxu0 0
    %1477 = vmatpush1.bf16.msra.mxu0 %v1323
    %1478 = vmatprep.subr.bf16.mxu0 0
    %1479 = vmatpush1.bf16.msra.mxu0 %v1324
    %1480 = vmatprep.subr.bf16.mxu0 0
    %1481 = vmatpush1.bf16.msra.mxu0 %v1325
    %1482 = vmatprep.subr.bf16.mxu0 0
    %1483 = vmatpush1.bf16.msra.mxu0 %v1326
    %1484 = vmatprep.subr.bf16.mxu0 0
    %1485 = vmatpush1.bf16.msra.mxu0 %v1327
    %1486 = vmatprep.subr.bf16.mxu0 0
    %1487 = vmatpush1.bf16.msra.mxu0 %v1328
    %1488 = vmatprep.subr.bf16.mxu0 0
    %1489 = vmatpush1.bf16.msra.mxu0 %v1329
    %1490 = vmatprep.subr.bf16.mxu0 0
    %1491 = vmatpush1.bf16.msra.mxu0 %v1330
    %1492 = vmatprep.subr.bf16.mxu0 0
    %1493 = vmatpush1.bf16.msra.mxu0 %v1331
    %1494 = vmatprep.subr.bf16.mxu0 0
    %1495 = vmatpush1.bf16.msra.mxu0 %v1332
    %1496 = vmatprep.subr.bf16.mxu0 0
    %1497 = vmatpush1.bf16.msra.mxu0 %v1333
    %1498 = vmatprep.subr.bf16.mxu0 0
    %1499 = vmatpush1.bf16.msra.mxu0 %v1334
    %1500 = vmatprep.subr.bf16.mxu0 0
    %1501 = vmatpush1.bf16.msra.mxu0 %v1335
    %1502 = vmatprep.subr.bf16.mxu0 0
    %1503 = vmatpush1.bf16.msra.mxu0 %v1336
    %1504 = vmatprep.mubr.bf16.mxu0 %v972
    %1505 = vmatmul.mubr.bf16.gmra.mrb[0].mxu0 %v970
    %v1506 = vpop.f32.mrb[0].mxu0
    %v1507 = vadd.f32 %v1467, %v1506
    %v1508 = vpop.f32.mrb[0].mxu0
    %v1509 = vpop.f32.mrb[0].mxu0
    %v1510 = vpop.f32.mrb[0].mxu0
    %1511 = vdwg.mxu0
    %1512 = vmatprep.subr.bf16.mxu0 0
    %1513 = vmatpush1.bf16.msra.mxu0 %v1337
    %1514 = vmatprep.subr.bf16.mxu0 0
    %1515 = vmatpush1.bf16.msra.mxu0 %v1338
    %1516 = vmatprep.subr.bf16.mxu0 0
    %1517 = vmatpush1.bf16.msra.mxu0 0
    %1518 = vmatprep.subr.bf16.mxu0 0
    %1519 = vmatpush1.bf16.msra.mxu0 0
    %1520 = vmatprep.subr.bf16.mxu0 0
    %1521 = vmatpush1.bf16.msra.mxu0 0
    %1522 = vmatprep.subr.bf16.mxu0 0
    %1523 = vmatpush1.bf16.msra.mxu0 0
    %1524 = vmatprep.subr.bf16.mxu0 0
    %1525 = vmatpush1.bf16.msra.mxu0 0
    %1526 = vmatprep.subr.bf16.mxu0 0
    %1527 = vmatpush1.bf16.msra.mxu0 0
    %1528 = vmatprep.subr.bf16.mxu0 0
    %1529 = vmatpush1.bf16.msra.mxu0 0
    %1530 = vmatprep.subr.bf16.mxu0 0
    %1531 = vmatpush1.bf16.msra.mxu0 0
    %1532 = vmatprep.subr.bf16.mxu0 0
    %1533 = vmatpush1.bf16.msra.mxu0 0
    %1534 = vmatprep.subr.bf16.mxu0 0
    %1535 = vmatpush1.bf16.msra.mxu0 0
    %1536 = vmatprep.subr.bf16.mxu0 0
    %1537 = vmatpush1.bf16.msra.mxu0 0
    %1538 = vmatprep.subr.bf16.mxu0 0
    %1539 = vmatpush1.bf16.msra.mxu0 0
    %1540 = vmatprep.subr.bf16.mxu0 0
    %1541 = vmatpush1.bf16.msra.mxu0 0
    %1542 = vmatprep.subr.bf16.mxu0 0
    %1543 = vmatpush1.bf16.msra.mxu0 0
    %1544 = vmatprep.mubr.bf16.mxu0 0
    %1545 = vmatmul.mubr.bf16.gmra.mrb[0].mxu0 %v1390
    %v1546 = vpop.f32.mrb[0].mxu0
    %v1547 = vadd.f32 %v1507, %v1546
    %v1548 = vpop.f32.mrb[0].mxu0
    %v1549 = vpop.f32.mrb[0].mxu0
    %v1550 = vpop.f32.mrb[0].mxu0
    %1551 = vdwg.mxu0
    %v1552 = vld [vmem:[%s4 + $0x20] sm:$0xf0]
    %v1553 = vld [vmem:[%s4 + $0x30] sm:$0x3]
    %vm1556 = vcmask 1043456
    %v1557 = vrot.slane %v1552, 4
    %v1558 = vrot.slane %v1553, 4
    %v1559 = vsel %vm1556, %v1557, %v1558
    %v1561 = vmul.f32 %v1547, %v1559
    %v1562 = vld [vmem:[%s4 + $0x30] sm:$0xfc]
    %v1564 = vrot.slane %v1562, 2
    %v1566 = vadd.f32 %v1561, %v1564
    %v1567 = vmax.f32 %v1566, 0.0
    %v1568 = vpack.c.bf16 %v1567, %v1567
    %v1570 = vshrl.u32 %v1568, 16
    %1572 = vrot.lane.b32.xlu0 %v1570, 96
    %v1573 = vpop.permute.xlu0 %1572
    %v1575 = vrot.slane %v1568, 1
    %1576 = vrot.lane.b32.xlu0 %v1575, 64
    %v1577 = vpop.permute.xlu0 %1576
    %v1578 = vrot.slane %v1570, 1
    %1579 = vrot.lane.b32.xlu0 %v1578, 32
    %v1580 = vpop.permute.xlu0 %1579
    %v1581 = vrot.slane %v1568, 2
    %v1582 = vrot.slane %v1570, 2
    %1583 = vrot.lane.b32.xlu0 %v1582, 96
    %v1584 = vpop.permute.xlu0 %1583
    %v1586 = vsel %vm984, %v1568, %v1573
    %v1589 = vsel %vm979, %v1573, %v1577
    %v1592 = vsel %vm975, %v1577, %v1580
    %v1596 = vsel %vm984, %v1581, %v1584
    %v1598 = vld [vmem:[%s3] sm:$0xf]
    %v1599 = vld [vmem:[%s3 + $0x4] sm:$0xf]
    %v1600 = vld [vmem:[%s3 + $0x8] sm:$0xf]
    %v1601 = vld [vmem:[%s3 + $0xc] sm:$0xf]
    %v1602 = vld [vmem:[%s3 + $0x10] sm:$0xf]
    %v1603 = vld [vmem:[%s3 + $0x14] sm:$0xf]
    %v1604 = vld [vmem:[%s3 + $0x18] sm:$0xf]
    %v1605 = vld [vmem:[%s3 + $0x1c] sm:$0xf]
    %v1606 = vld [vmem:[%s3 + $0x20] sm:$0xf]
    %v1607 = vld [vmem:[%s3 + $0x24] sm:$0xf]
    %v1608 = vld [vmem:[%s3 + $0x28] sm:$0xf]
    %v1609 = vld [vmem:[%s3 + $0x2c] sm:$0xf]
    %v1610 = vld [vmem:[%s3 + $0x30] sm:$0xf]
    %v1611 = vld [vmem:[%s3 + $0x34] sm:$0xf]
    %v1612 = vld [vmem:[%s3 + $0x38] sm:$0xf]
    %v1613 = vld [vmem:[%s3 + $0x3c] sm:$0xf]
    %v1614 = vld [vmem:[%s3 + $0x40] sm:$0xf]
    %v1615 = vld [vmem:[%s3 + $0x44] sm:$0xf]
    %v1616 = vld [vmem:[%s3 + $0x48] sm:$0xf]
    %v1617 = vld [vmem:[%s3 + $0x4c] sm:$0xf]
    %v1618 = vld [vmem:[%s3 + $0x50] sm:$0xf]
    %v1619 = vld [vmem:[%s3 + $0x54] sm:$0xf]
    %v1620 = vld [vmem:[%s3 + $0x58] sm:$0xf]
    %v1621 = vld [vmem:[%s3 + $0x5c] sm:$0xf]
    %v1622 = vld [vmem:[%s3 + $0x60] sm:$0xf]
    %v1623 = vld [vmem:[%s3 + $0x64] sm:$0xf]
    %v1624 = vld [vmem:[%s3 + $0x68] sm:$0xf]
    %v1625 = vld [vmem:[%s3 + $0x6c] sm:$0xf]
    %v1626 = vld [vmem:[%s3 + $0x70] sm:$0xf]
    %v1627 = vld [vmem:[%s3 + $0x74] sm:$0xf]
    %v1628 = vld [vmem:[%s3 + $0x78] sm:$0xf]
    %v1629 = vld [vmem:[%s3 + $0x7c] sm:$0xf]
    %v1630 = vld [vmem:[%s3 + $0x80] sm:$0xf]
    %v1631 = vld [vmem:[%s3 + $0x84] sm:$0xf]
    %v1632 = vld [vmem:[%s3 + $0x88] sm:$0xf]
    %v1633 = vld [vmem:[%s3 + $0x8c] sm:$0xf]
    %v1634 = vld [vmem:[%s3 + $0x90] sm:$0xf]
    %v1635 = vld [vmem:[%s3 + $0x94] sm:$0xf]
    %v1636 = vld [vmem:[%s3 + $0x98] sm:$0xf]
    %v1637 = vld [vmem:[%s3 + $0x9c] sm:$0xf]
    %v1638 = vld [vmem:[%s3 + $0xa0] sm:$0xf]
    %v1639 = vld [vmem:[%s3 + $0xa4] sm:$0xf]
    %v1640 = vld [vmem:[%s3 + $0xa8] sm:$0xf]
    %v1641 = vld [vmem:[%s3 + $0xac] sm:$0xf]
    %v1642 = vld [vmem:[%s3 + $0xb0] sm:$0xf]
    %v1643 = vld [vmem:[%s3 + $0xb4] sm:$0xf]
    %v1644 = vld [vmem:[%s3 + $0xb8] sm:$0xf]
    %v1645 = vld [vmem:[%s3 + $0xbc] sm:$0xf]
    %v1646 = vld [vmem:[%s3 + $0xc0] sm:$0xf]
    %v1647 = vld [vmem:[%s3 + $0xc4] sm:$0xf]
    %v1648 = vld [vmem:[%s3 + $0xc8] sm:$0xf]
    %v1649 = vld [vmem:[%s3 + $0xcc] sm:$0xf]
    %v1650 = vld [vmem:[%s3 + $0xd0] sm:$0xf]
    %v1651 = vld [vmem:[%s3 + $0xd4] sm:$0xf]
    %v1652 = vld [vmem:[%s3 + $0xd8] sm:$0xf]
    %v1653 = vld [vmem:[%s3 + $0xdc] sm:$0xf]
    %v1654 = vld [vmem:[%s3 + $0xe0] sm:$0xf]
    %v1655 = vld [vmem:[%s3 + $0xe4] sm:$0xf]
    %v1656 = vld [vmem:[%s3 + $0xe8] sm:$0xf]
    %v1657 = vld [vmem:[%s3 + $0xec] sm:$0xf]
    %v1658 = vld [vmem:[%s3 + $0xf0] sm:$0xf]
    %v1659 = vld [vmem:[%s3 + $0xf4] sm:$0xf]
    %v1660 = vld [vmem:[%s3 + $0xf8] sm:$0xf]
    %v1661 = vld [vmem:[%s3 + $0xfc] sm:$0xf]
    %v1662 = vld [vmem:[%s3 + $0x100] sm:$0xf]
    %v1663 = vld [vmem:[%s3 + $0x104] sm:$0xf]
    %v1664 = vld [vmem:[%s3 + $0x108] sm:$0xf]
    %v1665 = vld [vmem:[%s3 + $0x10c] sm:$0xf]
    %v1666 = vld [vmem:[%s3 + $0x110] sm:$0xf]
    %v1667 = vld [vmem:[%s3 + $0x114] sm:$0xf]
    %v1668 = vld [vmem:[%s3 + $0x118] sm:$0xf]
    %v1669 = vld [vmem:[%s3 + $0x11c] sm:$0xf]
    %v1742 = vunpack.c.l.b16 %v1598
    %v1743 = vunpack.c.l.b16 %v1599
    %v1744 = vunpack.c.l.b16 %v1600
    %v1745 = vunpack.c.l.b16 %v1601
    %v1746 = vunpack.c.l.b16 %v1602
    %v1747 = vunpack.c.l.b16 %v1603
    %v1748 = vunpack.c.l.b16 %v1604
    %v1749 = vunpack.c.l.b16 %v1605
    %v1750 = vunpack.c.l.b16 %v1606
    %v1751 = vunpack.c.l.b16 %v1607
    %v1752 = vunpack.c.l.b16 %v1608
    %v1753 = vunpack.c.l.b16 %v1609
    %v1754 = vunpack.c.l.b16 %v1610
    %v1755 = vunpack.c.l.b16 %v1611
    %v1756 = vunpack.c.l.b16 %v1612
    %v1757 = vunpack.c.l.b16 %v1613
    %v1758 = vunpack.c.l.b16 %v1614
    %v1759 = vunpack.c.l.b16 %v1615
    %v1760 = vunpack.c.l.b16 %v1616
    %v1761 = vunpack.c.l.b16 %v1617
    %v1762 = vunpack.c.l.b16 %v1618
    %v1763 = vunpack.c.l.b16 %v1619
    %v1764 = vunpack.c.l.b16 %v1620
    %v1765 = vunpack.c.l.b16 %v1621
    %v1766 = vunpack.c.l.b16 %v1622
    %v1767 = vunpack.c.l.b16 %v1623
    %v1768 = vunpack.c.l.b16 %v1624
    %v1769 = vunpack.c.l.b16 %v1625
    %v1770 = vunpack.c.l.b16 %v1626
    %v1771 = vunpack.c.l.b16 %v1627
    %v1772 = vunpack.c.l.b16 %v1628
    %v1773 = vunpack.c.l.b16 %v1629
    %v1774 = vunpack.c.l.b16 %v1630
    %v1775 = vunpack.c.l.b16 %v1631
    %v1776 = vunpack.c.l.b16 %v1632
    %v1777 = vunpack.c.l.b16 %v1633
    %v1778 = vunpack.c.l.b16 %v1634
    %v1779 = vunpack.c.l.b16 %v1635
    %v1780 = vunpack.c.l.b16 %v1636
    %v1781 = vunpack.c.l.b16 %v1637
    %v1782 = vunpack.c.l.b16 %v1638
    %v1783 = vunpack.c.l.b16 %v1639
    %v1784 = vunpack.c.l.b16 %v1640
    %v1785 = vunpack.c.l.b16 %v1641
    %v1786 = vunpack.c.l.b16 %v1642
    %v1787 = vunpack.c.l.b16 %v1643
    %v1788 = vunpack.c.l.b16 %v1644
    %v1789 = vunpack.c.l.b16 %v1645
    %v1790 = vunpack.c.l.b16 %v1646
    %v1791 = vunpack.c.l.b16 %v1647
    %v1792 = vunpack.c.l.b16 %v1648
    %v1793 = vunpack.c.l.b16 %v1649
    %v1794 = vunpack.c.l.b16 %v1650
    %v1795 = vunpack.c.l.b16 %v1651
    %v1796 = vunpack.c.l.b16 %v1652
    %v1797 = vunpack.c.l.b16 %v1653
    %v1798 = vunpack.c.l.b16 %v1654
    %v1799 = vunpack.c.l.b16 %v1655
    %v1800 = vunpack.c.l.b16 %v1656
    %v1801 = vunpack.c.l.b16 %v1657
    %v1802 = vunpack.c.l.b16 %v1658
    %v1803 = vunpack.c.l.b16 %v1659
    %v1804 = vunpack.c.l.b16 %v1660
    %v1805 = vunpack.c.l.b16 %v1661
    %v1806 = vunpack.c.l.b16 %v1662
    %v1807 = vunpack.c.l.b16 %v1663
    %v1808 = vunpack.c.l.b16 %v1664
    %v1809 = vunpack.c.l.b16 %v1665
    %v1810 = vunpack.c.l.b16 %v1666
    %v1811 = vunpack.c.l.b16 %v1667
    %v1812 = vunpack.c.l.b16 %v1668
    %v1813 = vunpack.c.l.b16 %v1669
    %v1814 = vpack.c.b16 %v1743, %v1742
    %v1815 = vpack.c.b16 %v1745, %v1744
    %v1816 = vpack.c.b16 %v1747, %v1746
    %v1817 = vpack.c.b16 %v1749, %v1748
    %v1818 = vpack.c.b16 %v1751, %v1750
    %v1819 = vpack.c.b16 %v1753, %v1752
    %v1820 = vpack.c.b16 %v1755, %v1754
    %v1821 = vpack.c.b16 %v1757, %v1756
    %v1822 = vpack.c.b16 %v1759, %v1758
    %v1823 = vpack.c.b16 %v1761, %v1760
    %v1824 = vpack.c.b16 %v1763, %v1762
    %v1825 = vpack.c.b16 %v1765, %v1764
    %v1826 = vpack.c.b16 %v1767, %v1766
    %v1827 = vpack.c.b16 %v1769, %v1768
    %v1828 = vpack.c.b16 %v1771, %v1770
    %v1829 = vpack.c.b16 %v1773, %v1772
    %v1830 = vpack.c.b16 %v1775, %v1774
    %v1831 = vpack.c.b16 %v1777, %v1776
    %v1832 = vpack.c.b16 %v1779, %v1778
    %v1833 = vpack.c.b16 %v1781, %v1780
    %v1834 = vpack.c.b16 %v1783, %v1782
    %v1835 = vpack.c.b16 %v1785, %v1784
    %v1836 = vpack.c.b16 %v1787, %v1786
    %v1837 = vpack.c.b16 %v1789, %v1788
    %v1838 = vpack.c.b16 %v1791, %v1790
    %v1839 = vpack.c.b16 %v1793, %v1792
    %v1840 = vpack.c.b16 %v1795, %v1794
    %v1841 = vpack.c.b16 %v1797, %v1796
    %v1842 = vpack.c.b16 %v1799, %v1798
    %v1843 = vpack.c.b16 %v1801, %v1800
    %v1844 = vpack.c.b16 %v1803, %v1802
    %v1845 = vpack.c.b16 %v1805, %v1804
    %v1846 = vpack.c.b16 %v1807, %v1806
    %v1847 = vpack.c.b16 %v1809, %v1808
    %v1848 = vpack.c.b16 %v1811, %v1810
    %v1849 = vpack.c.b16 %v1813, %v1812
    %v1886 = vsel %vm979, %v1584, 0
    %1888 = vmatprep.subr.bf16.mxu0 0
    %1889 = vmatpush1.bf16.msra.mxu0 %v1814
    %1890 = vmatprep.subr.bf16.mxu0 0
    %1891 = vmatpush1.bf16.msra.mxu0 %v1815
    %1892 = vmatprep.subr.bf16.mxu0 0
    %1893 = vmatpush1.bf16.msra.mxu0 %v1816
    %1894 = vmatprep.subr.bf16.mxu0 0
    %1895 = vmatpush1.bf16.msra.mxu0 %v1817
    %1896 = vmatprep.subr.bf16.mxu0 0
    %1897 = vmatpush1.bf16.msra.mxu0 %v1818
    %1898 = vmatprep.subr.bf16.mxu0 0
    %1899 = vmatpush1.bf16.msra.mxu0 %v1819
    %1900 = vmatprep.subr.bf16.mxu0 0
    %1901 = vmatpush1.bf16.msra.mxu0 %v1820
    %1902 = vmatprep.subr.bf16.mxu0 0
    %1903 = vmatpush1.bf16.msra.mxu0 %v1821
    %1904 = vmatprep.subr.bf16.mxu0 0
    %1905 = vmatpush1.bf16.msra.mxu0 %v1822
    %1906 = vmatprep.subr.bf16.mxu0 0
    %1907 = vmatpush1.bf16.msra.mxu0 %v1823
    %1908 = vmatprep.subr.bf16.mxu0 0
    %1909 = vmatpush1.bf16.msra.mxu0 %v1824
    %1910 = vmatprep.subr.bf16.mxu0 0
    %1911 = vmatpush1.bf16.msra.mxu0 %v1825
    %1912 = vmatprep.subr.bf16.mxu0 0
    %1913 = vmatpush1.bf16.msra.mxu0 %v1826
    %1914 = vmatprep.subr.bf16.mxu0 0
    %1915 = vmatpush1.bf16.msra.mxu0 %v1827
    %1916 = vmatprep.subr.bf16.mxu0 0
    %1917 = vmatpush1.bf16.msra.mxu0 %v1828
    %1918 = vmatprep.subr.bf16.mxu0 0
    %1919 = vmatpush1.bf16.msra.mxu0 %v1829
    %1920 = vmatprep.mubr.bf16.mxu0 %v1589
    %1921 = vmatmul.mubr.bf16.gmra.mrb[0].mxu0 %v1586
    %v1922 = vpop.f32.mrb[0].mxu0
    %v1923 = vadd.f32 0.0, %v1922
    %v1924 = vpop.f32.mrb[0].mxu0
    %v1925 = vpop.f32.mrb[0].mxu0
    %v1926 = vpop.f32.mrb[0].mxu0
    %1927 = vdwg.mxu0
    %1928 = vmatprep.subr.bf16.mxu0 0
    %1929 = vmatpush1.bf16.msra.mxu0 %v1830
    %1930 = vmatprep.subr.bf16.mxu0 0
    %1931 = vmatpush1.bf16.msra.mxu0 %v1831
    %1932 = vmatprep.subr.bf16.mxu0 0
    %1933 = vmatpush1.bf16.msra.mxu0 %v1832
    %1934 = vmatprep.subr.bf16.mxu0 0
    %1935 = vmatpush1.bf16.msra.mxu0 %v1833
    %1936 = vmatprep.subr.bf16.mxu0 0
    %1937 = vmatpush1.bf16.msra.mxu0 %v1834
    %1938 = vmatprep.subr.bf16.mxu0 0
    %1939 = vmatpush1.bf16.msra.mxu0 %v1835
    %1940 = vmatprep.subr.bf16.mxu0 0
    %1941 = vmatpush1.bf16.msra.mxu0 %v1836
    %1942 = vmatprep.subr.bf16.mxu0 0
    %1943 = vmatpush1.bf16.msra.mxu0 %v1837
    %1944 = vmatprep.subr.bf16.mxu0 0
    %1945 = vmatpush1.bf16.msra.mxu0 %v1838
    %1946 = vmatprep.subr.bf16.mxu0 0
    %1947 = vmatpush1.bf16.msra.mxu0 %v1839
    %1948 = vmatprep.subr.bf16.mxu0 0
    %1949 = vmatpush1.bf16.msra.mxu0 %v1840
    %1950 = vmatprep.subr.bf16.mxu0 0
    %1951 = vmatpush1.bf16.msra.mxu0 %v1841
    %1952 = vmatprep.subr.bf16.mxu0 0
    %1953 = vmatpush1.bf16.msra.mxu0 %v1842
    %1954 = vmatprep.subr.bf16.mxu0 0
    %1955 = vmatpush1.bf16.msra.mxu0 %v1843
    %1956 = vmatprep.subr.bf16.mxu0 0
    %1957 = vmatpush1.bf16.msra.mxu0 %v1844
    %1958 = vmatprep.subr.bf16.mxu0 0
    %1959 = vmatpush1.bf16.msra.mxu0 %v1845
    %1960 = vmatprep.mubr.bf16.mxu0 %v1596
    %1961 = vmatmul.mubr.bf16.gmra.mrb[0].mxu0 %v1592
    %v1962 = vpop.f32.mrb[0].mxu0
    %v1963 = vadd.f32 %v1923, %v1962
    %v1964 = vpop.f32.mrb[0].mxu0
    %v1965 = vpop.f32.mrb[0].mxu0
    %v1966 = vpop.f32.mrb[0].mxu0
    %1967 = vdwg.mxu0
    %1968 = vmatprep.subr.bf16.mxu0 0
    %1969 = vmatpush1.bf16.msra.mxu0 %v1846
    %1970 = vmatprep.subr.bf16.mxu0 0
    %1971 = vmatpush1.bf16.msra.mxu0 %v1847
    %1972 = vmatprep.subr.bf16.mxu0 0
    %1973 = vmatpush1.bf16.msra.mxu0 %v1848
    %1974 = vmatprep.subr.bf16.mxu0 0
    %1975 = vmatpush1.bf16.msra.mxu0 %v1849
    %1976 = vmatprep.subr.bf16.mxu0 0
    %1977 = vmatpush1.bf16.msra.mxu0 0
    %1978 = vmatprep.subr.bf16.mxu0 0
    %1979 = vmatpush1.bf16.msra.mxu0 0
    %1980 = vmatprep.subr.bf16.mxu0 0
    %1981 = vmatpush1.bf16.msra.mxu0 0
    %1982 = vmatprep.subr.bf16.mxu0 0
    %1983 = vmatpush1.bf16.msra.mxu0 0
    %1984 = vmatprep.subr.bf16.mxu0 0
    %1985 = vmatpush1.bf16.msra.mxu0 0
    %1986 = vmatprep.subr.bf16.mxu0 0
    %1987 = vmatpush1.bf16.msra.mxu0 0
    %1988 = vmatprep.subr.bf16.mxu0 0
    %1989 = vmatpush1.bf16.msra.mxu0 0
    %1990 = vmatprep.subr.bf16.mxu0 0
    %1991 = vmatpush1.bf16.msra.mxu0 0
    %1992 = vmatprep.subr.bf16.mxu0 0
    %1993 = vmatpush1.bf16.msra.mxu0 0
    %1994 = vmatprep.subr.bf16.mxu0 0
    %1995 = vmatpush1.bf16.msra.mxu0 0
    %1996 = vmatprep.subr.bf16.mxu0 0
    %1997 = vmatpush1.bf16.msra.mxu0 0
    %1998 = vmatprep.subr.bf16.mxu0 0
    %1999 = vmatpush1.bf16.msra.mxu0 0
    %2000 = vmatprep.mubr.bf16.mxu0 0
    %2001 = vmatmul.mubr.bf16.gmra.mrb[0].mxu0 %v1886
    %v2002 = vpop.f32.mrb[0].mxu0
    %v2003 = vadd.f32 %v1963, %v2002
    %v2004 = vpop.f32.mrb[0].mxu0
    %v2005 = vpop.f32.mrb[0].mxu0
    %v2006 = vpop.f32.mrb[0].mxu0
    %2007 = vdwg.mxu0
    %v2008 = vld [vmem:[%s4 + $0x40] ss:$0 sm:$0xff]
    %v2009 = vmul.f32 %v2003, %v2008
    %v2010 = vld [vmem:[%s4 + $0x41] ss:$0 sm:$0xff]
    %v2011 = vadd.f32 %v2009, %v2010
    %vm2012 = vcmp.gt.f32.partialorder %v2011, 20.0
    %v2013 = vmin.f32 %v2011, 20.0
    %v2014 = vmul.f32 %v2013, 1.442695
    %v2015 = vpow.pop %v2014
    %v2016 = vadd.f32 %v2015, 1.0
    %v2017 = vlog2.pop %v2016
    %v2018 = vmul.f32 %v2017, 0.6931472
    %v2019 = vmul.f32 -0.5, %v2015
    %v2020 = vadd.f32 %v2019, 1.0
    %v2021 = vmul.f32 %v2020, %v2015
    %v2022 = vand.u32 2147483647, %v2015
    %vm2023 = vcmp.lt.f32.partialorder %v2022, 0.0004427343
    %v2024 = vsel %vm2023, %v2021, %v2018
    %v2025 = vsel %vm2012, %v2011, %v2024
    %vm2026 = vcmask 73728
    %2027 = vst.msk [vmem:[#allocation2] sm:$0x1] %vm2026, %v2025
    // Predicated region
    $region22: #{tpu_custom_call.1} parent=1 // pred_check
      _
    $region23: #{tpu_custom_call.1} parent=1 // pred_check_branch
      %2029 = sbr.rel (0) target = $region25
    $region24: #{tpu_custom_call.1} parent=1 // pred_region
      %s2031 = ssub.s32 16, 16
      %2032 = vsyncadd [#allocation3], %s2031
      %s2034 = sshll.u32 [#allocation2], 4
      %s2035 = int_to_ptr.vmem [resolvable:$true] %s2034
      %2037 = dma.vmem_to_hbm [thread:$0]  %s2035, 16, %s5, [#allocation3]
    $region25: #{tpu_custom_call.1} parent=1 // pred_fallthru
      _
    // Predicated region
    $region26: #{tpu_custom_call.1} parent=1 // pred_check
      _
    $region27: #{tpu_custom_call.1} parent=1 // pred_check_branch
      %2039 = sbr.rel (0) target = $region29
    $region28: #{tpu_custom_call.1} parent=1 // pred_region
      %2040 = dma.done [#allocation3], 16
    $region29: #{tpu_custom_call.1} parent=1 // pred_fallthru
      _
    %2041 = vsyncpa [#allocation3], 1

</llo_original>
